<compile_context>
chip_gen: v7x
topology: tpu7x:2x2x1
jax: 0.10.0
libtpu: 0.0.40
codegen_flags: <defaults>
</compile_context>

<pallas_src>
import functools
import math

import jax
import jax.numpy as jnp
import numpy as np
from jax.experimental import pallas as pl
from jax.experimental.pallas import tpu as pltpu


# ----------------------------------------------------------------------------
# Generation-aware VMEM limit
# ----------------------------------------------------------------------------
def _pick_vmem_limit():
    try:
        info = pltpu.get_tpu_info()
        cap = int(getattr(info, "vmem_capacity_bytes", 0))
    except Exception:
        cap = 0
    if cap >= 96 * 1024 * 1024:          # v5e / v6e : 128 MiB physical
        return 64 * 1024 * 1024
    return 32 * 1024 * 1024              # v7x : 64 MiB physical


_VMEM_LIMIT = _pick_vmem_limit()


def _round_up(x, m):
    return ((x + m - 1) // m) * m


# ----------------------------------------------------------------------------
# Tile pickers
# ----------------------------------------------------------------------------
def _pick_mm_tiles(M, Kp, Np):
    """Tiles for the (small) im2col matmul path.  Kp, Np are already 128-padded."""
    if Np <= 512:
        tn = Np
    elif Np % 256 == 0:
        tn = 256
    else:
        tn = 128
    if Kp <= 2048:
        tk = Kp
    else:
        tk = max(d for d in range(128, 2049, 128) if Kp % d == 0)
    if M <= 512:
        tm = max(16, _round_up(M, 16))
    elif M >= 8192:
        tm = 1024
    else:
        tm = 512
    Mp = _round_up(M, tm)
    # megacore: expose >=2 parallel tiles when the grid would otherwise be (1,1,*)
    if Mp // tm == 1 and Np // tn == 1 and Mp >= 32 and Mp % 16 == 0:
        tm = Mp // 2
    return tm, tn, tk, Mp


def _pick_conv_row_tile(Hout, Wout, Cin, Np, kh, kw, win_w):
    """Row tile for the fused stride-1 conv kernel (th must divide Hout)."""
    if Wout % 8 != 0:
        # keeps every in-kernel reshape layout-trivial (unit leading dim) and
        # still exposes Hout parallel tiles for megacore.
        return 1
    budget = min(_VMEM_LIMIT // 2, 12 * 1024 * 1024)
    wbytes = 2 * kh * kw * Cin * Np * 2 + 2 * Np * 4        # weights + bias (x2 bufs)

    def fits(th):
        acc = th * Wout * Np * 4
        win = (th + kh - 1) * win_w * Cin * 2
        outb = 2 * th * Wout * Np * 2
        return wbytes + acc + win + outb <= budget

    divs = [d for d in range(1, Hout + 1) if Hout % d == 0 and fits(d)]
    if not divs:
        divs = [1]
    multi = [d for d in divs if Hout // d >= 2]              # >=2 tiles for megacore
    pool = multi if multi else divs
    return max(pool)


def _pick_row_tile(H):
    """Row tile for the correlation kernel (8-aligned or full, >=2 tiles if possible)."""
    for cand in (32, 16, 8):
        if H % cand == 0 and H // cand >= 2:
            return cand
    return H


# ----------------------------------------------------------------------------
# Pallas kernels
# ----------------------------------------------------------------------------
def _matmul_bias_kernel(x_ref, w_ref, b_ref, o_ref, acc_ref, *, leaky):
    """One (tm, tn) output tile; K reduction over grid axis 2."""
    k = pl.program_id(2)

    @pl.when(k == 0)
    def _init():
        acc_ref[...] = jnp.zeros_like(acc_ref)

    acc_ref[...] += jnp.dot(x_ref[...], w_ref[...],
                            preferred_element_type=jnp.float32)

    @pl.when(k == pl.num_programs(2) - 1)
    def _epilogue():
        acc = acc_ref[...] + b_ref[...]
        if leaky:
            acc = jnp.where(acc >= 0.0, acc, 0.1 * acc)
        o_ref[...] = acc.astype(o_ref.dtype)


def matmul_bias(xm, wmp, bp, n_valid, leaky, out_dtype):
    """Y = (leaky)(X @ W + b). xm:(M,K); wmp:(Kp,Np) prepadded bf16; bp:(1,Np) f32."""
    M, K = xm.shape
    Kp, Np = wmp.shape
    tm, tn, tk, Mp = _pick_mm_tiles(M, Kp, Np)
    xb = jnp.pad(xm.astype(jnp.bfloat16), ((0, Mp - M), (0, Kp - K)))
    grid = (Mp // tm, Np // tn, Kp // tk)
    out = pl.pallas_call(
        functools.partial(_matmul_bias_kernel, leaky=leaky),
        out_shape=jax.ShapeDtypeStruct((Mp, Np), out_dtype),
        grid_spec=pltpu.PrefetchScalarGridSpec(
            num_scalar_prefetch=0,
            grid=grid,
            in_specs=[pl.BlockSpec((tm, tk), lambda i, j, k: (i, k)),
                      pl.BlockSpec((tk, tn), lambda i, j, k: (k, j)),
                      pl.BlockSpec((1, tn), lambda i, j, k: (0, j))],
            out_specs=pl.BlockSpec((tm, tn), lambda i, j, k: (i, j)),
            scratch_shapes=[pltpu.VMEM((tm, tn), jnp.float32)]),
        compiler_params=pltpu.CompilerParams(
            dimension_semantics=("parallel", "parallel", "arbitrary"),
            vmem_limit_bytes=_VMEM_LIMIT),
    )(xb, wmp, bp)
    return out[:M, :n_valid]


def _conv_stride1_kernel(xp_hbm, w_ref, b_ref, o_ref, xwin, sem, acc_ref, *,
                         th, W, kh, kw, leaky):
    """Fused im2col conv (stride 1), one row tile of `th` output rows.

    xp_hbm : (Hout+kh-1, W+kw-1, Cin) padded NHWC activation, raw HBM ref.
    w_ref  : (kh*kw, Cin, Np) bf16 weights (resident).
    b_ref  : (1, Np) f32 bias.
    o_ref  : (th, W, Np) output block.
    The (th+kh-1)-row window is DMA'd manually; the kh*kw tap matmuls accumulate
    into the f32 VMEM scratch, bias + optional leaky-ReLU in the epilogue.
    """
    r0 = pl.program_id(0) * th
    # TODO(synk): window DMA is synchronous (start+wait) — cross-step prefetch
    # would need per-core pipeline priming which conflicts with "parallel" grids.
    cp = pltpu.make_async_copy(xp_hbm.at[pl.ds(r0, th + kh - 1)], xwin, sem.at[0])
    cp.start()
    cp.wait()

    acc_ref[...] = jnp.zeros_like(acc_ref)
    for dy in range(kh):
        for dx in range(kw):
            lhs = xwin[dy:dy + th, dx:dx + W, :]
            lhs = lhs.reshape(th * W, lhs.shape[-1])
            acc_ref[...] += jnp.dot(lhs, w_ref[dy * kw + dx],
                                    preferred_element_type=jnp.float32)

    y = acc_ref[...] + b_ref[...]
    if leaky:
        y = jnp.where(y >= 0.0, y, 0.1 * y)
    o_ref[...] = y.reshape(th, W, y.shape[-1]).astype(o_ref.dtype)


def conv2d_fused(x_hwc, prep, leaky=True, out_dtype=jnp.bfloat16):
    """Stride-1 conv, NHWC in/out.  prep from _prepare_fused()."""
    H, W, Cin = x_hwc.shape
    kh, kw, pad = prep["kh"], prep["kw"], prep["pad"]
    Np = prep["w3"].shape[-1]
    Hout = H + 2 * pad - kh + 1
    Wout = W + 2 * pad - kw + 1
    xp = jnp.pad(x_hwc.astype(jnp.bfloat16), ((pad, pad), (pad, pad), (0, 0)))
    win_w = Wout + kw - 1
    th = _pick_conv_row_tile(Hout, Wout, Cin, Np, kh, kw, win_w)
    out = pl.pallas_call(
        functools.partial(_conv_stride1_kernel, th=th, W=Wout, kh=kh, kw=kw,
                          leaky=leaky),
        out_shape=jax.ShapeDtypeStruct((Hout, Wout, Np), out_dtype),
        grid_spec=pltpu.PrefetchScalarGridSpec(
            num_scalar_prefetch=0,
            grid=(Hout // th,),
            in_specs=[pl.BlockSpec(memory_space=pl.ANY),
                      pl.BlockSpec((kh * kw, Cin, Np), lambda i: (0, 0, 0)),
                      pl.BlockSpec((1, Np), lambda i: (0, 0))],
            out_specs=pl.BlockSpec((th, Wout, Np), lambda i: (i, 0, 0)),
            scratch_shapes=[pltpu.VMEM((th + kh - 1, win_w, Cin), jnp.bfloat16),
                            pltpu.SemaphoreType.DMA((1,)),
                            pltpu.VMEM((th * Wout, Np), jnp.float32)]),
        compiler_params=pltpu.CompilerParams(
            dimension_semantics=("parallel",),
            vmem_limit_bytes=_VMEM_LIMIT),
    )(xp, prep["w3"], prep["b"])
    return out[:, :, :prep["cout"]]


def _corr_kernel(f_ref, s_ref, o_ref, *, th, W, inv_c):
    """Cost volume for one block of `th` output rows.

    f_ref: (C, th, W) first features (bf16).
    s_ref: (C, H+8, W+8) padded second features (bf16, resident across the grid).
    o_ref: (81, th, W).
    The per-dy row slice is hoisted out of the dx loop; the 9x9 displacement
    loop is fully static so loads / VPU adds / stores interleave.  The channel
    reduction is over the leading (non-lane) axis -> VPU, not XLU.
    """
    r0 = pl.program_id(0) * th
    f = f_ref[...].astype(jnp.float32)                             # (C, th, W)
    for dy in range(9):
        s_rows = s_ref[:, pl.ds(r0 + dy, th), :].astype(jnp.float32)   # (C, th, W+8)
        for dx in range(9):
            s = s_rows[:, :, dx:dx + W]                            # (C, th, W)
            acc = jnp.sum(f * s, axis=0) * inv_c                   # (th, W)
            o_ref[dy * 9 + dx, :, :] = jnp.where(
                acc >= 0.0, acc, 0.1 * acc).astype(o_ref.dtype)


def correlation_leaky(first_hwc, second_hwc):
    """leaky_relu(FunctionCorrelation(first, second)); NHWC in, (H, W, 81) bf16 out."""
    H, W, C = first_hwc.shape
    th = _pick_row_tile(H)
    f = jnp.transpose(first_hwc.astype(jnp.bfloat16), (2, 0, 1))       # (C, H, W)
    s = jnp.transpose(second_hwc.astype(jnp.bfloat16), (2, 0, 1))
    sp = jnp.pad(s, ((0, 0), (4, 4), (4, 4)))
    # TODO(synk): lane-dense flattening (last dim th*W) at small W and windowed /
    # Buffered(1) staging of the resident second map on v7x left for a follow-up.
    out = pl.pallas_call(
        functools.partial(_corr_kernel, th=th, W=W, inv_c=1.0 / C),
        out_shape=jax.ShapeDtypeStruct((81, H, W), jnp.bfloat16),
        grid_spec=pltpu.PrefetchScalarGridSpec(
            num_scalar_prefetch=0,
            grid=(H // th,),
            in_specs=[pl.BlockSpec((C, th, W), lambda i: (0, i, 0)),
                      pl.BlockSpec((C, H + 8, W + 8), lambda i: (0, 0, 0))],
            out_specs=pl.BlockSpec((81, th, W), lambda i: (0, i, 0))),
        compiler_params=pltpu.CompilerParams(
            dimension_semantics=("parallel",),
            vmem_limit_bytes=_VMEM_LIMIT),
    )(f, sp)
    return jnp.transpose(out, (1, 2, 0))                              # (H, W, 81)


# ----------------------------------------------------------------------------
# Weight preparation (cast / pad / reshape ONCE, not per call)
# ----------------------------------------------------------------------------
def _prepare_fused(w, b, pad):
    cout, cin, kh, kw = w.shape
    Np = _round_up(cout, 128)
    w3 = jnp.transpose(w, (2, 3, 1, 0)).reshape(kh * kw, cin, cout)
    w3 = jnp.pad(w3, ((0, 0), (0, 0), (0, Np - cout))).astype(jnp.bfloat16)
    b2 = jnp.pad(b.astype(jnp.float32), (0, Np - cout)).reshape(1, Np)
    return {"kind": "fused", "w3": w3, "b": b2, "kh": kh, "kw": kw,
            "pad": pad, "cout": cout, "cin": cin}


def _prepare_im2col(w, b, pad, stride):
    cout, cin, kh, kw = w.shape
    K = kh * kw * cin
    Kp = _round_up(K, 128)
    Np = _round_up(cout, 128)
    wm = jnp.transpose(w, (2, 3, 1, 0)).reshape(K, cout)
    wm = jnp.pad(wm, ((0, Kp - K), (0, Np - cout))).astype(jnp.bfloat16)
    b2 = jnp.pad(b.astype(jnp.float32), (0, Np - cout)).reshape(1, Np)
    return {"kind": "im2col", "wm": wm, "b": b2, "kh": kh, "kw": kw,
            "pad": pad, "stride": stride, "cout": cout, "cin": cin}


def prepare_conv(w, b, stride=1, pad=1):
    cout, cin, kh, kw = w.shape
    if stride == 1 and cin >= 8:
        return _prepare_fused(w, b, pad)
    return _prepare_im2col(w, b, pad, stride)


def prepare_deconv(w, b):
    # ConvTranspose2d(k=4,s=2,p=1) == stride-1 conv with flipped kernel / swapped
    # channels over the zero-inserted, (k-1-p)=2-padded input.
    wc = jnp.transpose(w[:, :, ::-1, ::-1], (1, 0, 2, 3))     # (Cout, Cin, 4, 4)
    return prepare_conv(wc, b, stride=1, pad=0)


# ----------------------------------------------------------------------------
# Conv wrappers (NHWC, bf16 activations)
# ----------------------------------------------------------------------------
def conv2d_im2col(x_hwc, prep, leaky=True, out_dtype=jnp.bfloat16):
    H, W, Cin = x_hwc.shape
    kh, kw, pad, stride = prep["kh"], prep["kw"], prep["pad"], prep["stride"]
    xp = jnp.pad(x_hwc.astype(jnp.bfloat16), ((pad, pad), (pad, pad), (0, 0)))
    Hout = (H + 2 * pad - kh) // stride + 1
    Wout = (W + 2 * pad - kw) // stride + 1
    cols = []
    for dy in range(kh):
        for dx in range(kw):
            patch = xp[dy:dy + (Hout - 1) * stride + 1:stride,
                       dx:dx + (Wout - 1) * stride + 1:stride, :]
            cols.append(patch.reshape(Hout * Wout, Cin))
    xm = jnp.concatenate(cols, axis=1)
    y = matmul_bias(xm, prep["wm"], prep["b"], prep["cout"], leaky, out_dtype)
    return y.reshape(Hout, Wout, prep["cout"])


def conv2d(x_hwc, prep, leaky=True, out_dtype=jnp.bfloat16):
    if prep["kind"] == "fused":
        return conv2d_fused(x_hwc, prep, leaky, out_dtype)
    return conv2d_im2col(x_hwc, prep, leaky, out_dtype)


def conv_transpose2d(x_hwc, prep):
    """PyTorch ConvTranspose2d(kernel=4, stride=2, padding=1), NHWC, f32 output."""
    H, W, Cin = x_hwc.shape
    xd = jnp.zeros((2 * H - 1, 2 * W - 1, Cin), jnp.bfloat16)
    xd = xd.at[::2, ::2, :].set(x_hwc.astype(jnp.bfloat16))      # zero-insert (stride 2)
    xd = jnp.pad(xd, ((2, 2), (2, 2), (0, 0)))                   # pad k-1-p = 2
    return conv2d(xd, prep, leaky=False, out_dtype=jnp.float32)


# ----------------------------------------------------------------------------
# Non-kernel glue matching the PyTorch reference semantics (NHWC internal)
# ----------------------------------------------------------------------------
def backwarp(ten_in, flow):
    # grid_sample(bilinear, zeros, align_corners=False) with partial-mask trick.
    # TODO(synk): data-dependent gather kept in plain JAX.
    H, W, C = ten_in.shape
    hor = jnp.linspace(-1.0 + 1.0 / W, 1.0 - 1.0 / W, W, dtype=jnp.float32)
    ver = jnp.linspace(-1.0 + 1.0 / H, 1.0 - 1.0 / H, H, dtype=jnp.float32)
    gx = hor[None, :] + flow[..., 0].astype(jnp.float32) / ((W - 1.0) / 2.0)
    gy = ver[:, None] + flow[..., 1].astype(jnp.float32) / ((H - 1.0) / 2.0)
    inp = jnp.concatenate([ten_in.astype(jnp.float32),
                           jnp.ones((H, W, 1), jnp.float32)], axis=-1)
    ix = (gx + 1.0) * W * 0.5 - 0.5
    iy = (gy + 1.0) * H * 0.5 - 0.5
    x0 = jnp.floor(ix); y0 = jnp.floor(iy)
    x1 = x0 + 1.0; y1 = y0 + 1.0
    wx1 = ix - x0; wx0 = 1.0 - wx1
    wy1 = iy - y0; wy0 = 1.0 - wy1

    def gather(yy, xx):
        valid = (xx >= 0) & (xx <= W - 1) & (yy >= 0) & (yy <= H - 1)
        xc = jnp.clip(xx, 0, W - 1).astype(jnp.int32)
        yc = jnp.clip(yy, 0, H - 1).astype(jnp.int32)
        return inp[yc, xc] * valid[..., None].astype(jnp.float32)

    out = (gather(y0, x0) * (wy0 * wx0)[..., None] + gather(y0, x1) * (wy0 * wx1)[..., None]
           + gather(y1, x0) * (wy1 * wx0)[..., None] + gather(y1, x1) * (wy1 * wx1)[..., None])
    mask = jnp.where(out[..., -1:] > 0.999, 1.0, 0.0)
    return (out[..., :-1] * mask).astype(jnp.bfloat16)


def sub_with_mag_dir(flow_hwc):
    # Reproduces the reference's torch.reshape (NOT a permute) on the NCHW tensor.
    H, W, _ = flow_hwc.shape
    nchw = jnp.transpose(flow_hwc.astype(jnp.float32), (2, 0, 1))   # (2, H, W)
    rs = nchw.reshape(H, W, 2)
    d0 = rs[..., 0]
    d1 = rs[..., 1]
    norm = jnp.sqrt(d0 * d0 + d1 * d1)
    ang = jnp.arctan2(d1, d0)
    ang = jnp.where(ang < 0, ang + 2.0 * np.pi, ang)
    return jnp.stack([norm, ang], axis=-1)                          # (H, W, 2)


def nearest_resize_hwc(x, h, w):
    # F.interpolate(size=(h,w)) default 'nearest': src = floor(dst * in/out)
    H, W = x.shape[0], x.shape[1]
    ys = jnp.floor(jnp.arange(h) * (H / h)).astype(jnp.int32)
    xs = jnp.floor(jnp.arange(w) * (W / w)).astype(jnp.int32)
    return x[ys][:, xs]


def image_preprocess(first, second):
    _, H, W = first.shape
    Hp = int(math.floor(math.ceil(H / 64.0) * 64.0))
    Wp = int(math.floor(math.ceil(W / 64.0) * 64.0))

    def prep(img):
        r = jax.image.resize(img.reshape(1, 3, H, W), (1, 3, Hp, Wp),
                             method="bilinear", antialias=False)
        return jnp.transpose(r[0], (1, 2, 0))                       # (Hp, Wp, 3) NHWC
    return prep(first), prep(second)


# ----------------------------------------------------------------------------
# Parameters (deterministic synthetic init, PyTorch-shaped raw -> prepared)
# ----------------------------------------------------------------------------
def init_conv(key, cout, cin, k=3):
    k1, k2 = jax.random.split(key)
    fan = cin * k * k
    w = jax.random.normal(k1, (cout, cin, k, k), jnp.float32) / np.sqrt(fan)
    b = jax.random.normal(k2, (cout,), jnp.float32) * 0.01
    return {"w": w, "b": b}


def init_deconv(key, cin, cout, k=4):
    k1, k2 = jax.random.split(key)
    fan = cin * k * k
    w = jax.random.normal(k1, (cin, cout, k, k), jnp.float32) / np.sqrt(fan)
    b = jax.random.normal(k2, (cout,), jnp.float32) * 0.01
    return {"w": w, "b": b}


def init_pwc_params(key):
    keys = iter(jax.random.split(key, 128))
    extractor = []
    chans = [3, 16, 32, 64, 96, 128, 196]
    for i in range(6):
        cin, cout = chans[i], chans[i + 1]
        extractor.append([init_conv(next(keys), cout, cin),
                          init_conv(next(keys), cout, cout),
                          init_conv(next(keys), cout, cout)])
    table = [None, None, 81 + 32 + 2 + 2, 81 + 64 + 2 + 2, 81 + 96 + 2 + 2,
             81 + 128 + 2 + 2, 81, None]
    decoders = {}
    for lvl in (2, 3, 4, 5, 6):
        prev, cur = table[lvl + 1], table[lvl]
        d = {}
        if lvl < 6:
            d["upflow"] = init_deconv(next(keys), 2, 2)
            d["upfeat"] = init_deconv(next(keys), prev + 128 + 128 + 96 + 64 + 32, 2)
        d["one"] = init_conv(next(keys), 128, cur)
        d["two"] = init_conv(next(keys), 128, cur + 128)
        d["thr"] = init_conv(next(keys), 96, cur + 256)
        d["fou"] = init_conv(next(keys), 64, cur + 352)
        d["fiv"] = init_conv(next(keys), 32, cur + 416)
        d["six"] = init_conv(next(keys), 2, cur + 448)
        decoders[lvl] = d
    # TODO(synk): netRefiner params omitted — Refiner is never called in forward().
    return {"extractor": extractor, "decoders": decoders}


def prepare_pwc_params(raw):
    ext = []
    for stage in raw["extractor"]:
        ext.append([prepare_conv(stage[0]["w"], stage[0]["b"], stride=2, pad=1),
                    prepare_conv(stage[1]["w"], stage[1]["b"], stride=1, pad=1),
                    prepare_conv(stage[2]["w"], stage[2]["b"], stride=1, pad=1)])
    dec = {}
    for lvl, d in raw["decoders"].items():
        pd = {}
        if "upflow" in d:
            pd["upflow"] = prepare_deconv(d["upflow"]["w"], d["upflow"]["b"])
            pd["upfeat"] = prepare_deconv(d["upfeat"]["w"], d["upfeat"]["b"])
        for name in ("one", "two", "thr", "fou", "fiv", "six"):
            pd[name] = prepare_conv(d[name]["w"], d[name]["b"], stride=1, pad=1)
        dec[lvl] = pd
    return {"extractor": ext, "decoders": dec}


# ----------------------------------------------------------------------------
# Forward pass
# ----------------------------------------------------------------------------
def extractor_forward(ext_params, x_hwc):
    feats = []
    for stage in ext_params:
        x_hwc = conv2d(x_hwc, stage[0], leaky=True)   # stride-2 (im2col path)
        x_hwc = conv2d(x_hwc, stage[1], leaky=True)   # stride-1 (fused path)
        x_hwc = conv2d(x_hwc, stage[2], leaky=True)
        feats.append(x_hwc)
    return feats


def decoder_forward(p, tenFirst, tenSecond, objPrevious, fltBackwarp):
    if objPrevious is None:
        tenVolume = correlation_leaky(tenFirst, tenSecond)            # (H, W, 81)
        tenFeat = tenVolume
    else:
        tenFlow = conv_transpose2d(objPrevious["tenFlow"], p["upflow"])   # (2H,2W,2) f32
        tenFeat = conv_transpose2d(objPrevious["tenFeat"], p["upfeat"])   # (2H,2W,2) f32
        warped = backwarp(tenSecond, tenFlow * fltBackwarp)
        tenVolume = correlation_leaky(tenFirst, warped)
        tenFeat = jnp.concatenate([tenVolume,
                                   tenFirst.astype(jnp.bfloat16),
                                   tenFlow.astype(jnp.bfloat16),
                                   tenFeat.astype(jnp.bfloat16)], axis=-1)
    tenFeat = jnp.concatenate([conv2d(tenFeat, p["one"]), tenFeat], axis=-1)
    tenFeat = jnp.concatenate([conv2d(tenFeat, p["two"]), tenFeat], axis=-1)
    tenFeat = jnp.concatenate([conv2d(tenFeat, p["thr"]), tenFeat], axis=-1)
    tenFeat = jnp.concatenate([conv2d(tenFeat, p["fou"]), tenFeat], axis=-1)
    tenFeat = jnp.concatenate([conv2d(tenFeat, p["fiv"]), tenFeat], axis=-1)
    tenFlow = conv2d(tenFeat, p["six"], leaky=False, out_dtype=jnp.float32)
    return {"tenFlow": tenFlow, "tenFeat": tenFeat}


def pwc_forward(params, first_image, second_image, feature_shape):
    tf, ts = image_preprocess(first_image, second_image)
    featsF = extractor_forward(params["extractor"], tf)
    featsS = extractor_forward(params["extractor"], ts)
    flt = {6: None, 5: 0.625, 4: 1.25, 3: 2.5, 2: 5.0}
    order = [6, 5, 4, 3, 2]
    objEstimate = [None]
    for i, lvl in enumerate(order):
        fd = decoder_forward(params["decoders"][lvl], featsF[-i - 1], featsS[-i - 1],
                             objEstimate[-1], flt[lvl])
        # Reference overwrites tenFlow with (magnitude, direction) INSIDE the loop,
        # so the next level's upflow/backwarp consumes it — preserved as-is.
        fd["tenFlow"] = sub_with_mag_dir(fd["tenFlow"])
        objEstimate.append(fd)
    layers = [l for l in reversed(objEstimate) if l is not None]
    out_layers = []
    for i in range(len(feature_shape)):
        h, w = feature_shape[i][2], feature_shape[i][3]
        feat = nearest_resize_hwc(layers[i]["tenFeat"], h, w)
        flow = nearest_resize_hwc(layers[i]["tenFlow"], h, w)
        out_layers.append({
            "tenFeat": jnp.transpose(feat, (2, 0, 1))[None].astype(jnp.float32),
            "tenFlow": jnp.transpose(flow, (2, 0, 1))[None].astype(jnp.float32)})
    return {"fpn_layers": out_layers}


# ----------------------------------------------------------------------------
if __name__ == "__main__":
    key = jax.random.PRNGKey(0)
    kp, k1, k2 = jax.random.split(key, 3)
    raw_params = init_pwc_params(kp)
    params = prepare_pwc_params(raw_params)          # cast / pad / reshape weights ONCE

    # Smallest valid inputs: 64x64 images (6 stride-2 pyramid levels -> 1x1).
    first_image = jax.random.uniform(k1, (3, 64, 64), jnp.float32)
    second_image = jax.random.uniform(k2, (3, 64, 64), jnp.float32)
    feature_shape = [(1, 256, 16, 16), (1, 256, 8, 8), (1, 256, 4, 4),
                     (1, 256, 2, 2), (1, 256, 1, 1)]

    out = pwc_forward(params, first_image, second_image, feature_shape)
    out = jax.tree_util.tree_map(jax.block_until_ready, out)
    print("KERNEL_OK")
</pallas_src>

<mosaic_0001>
module attributes {stable_mosaic.version = 11 : i64} {
  func.func @_matmul_bias_kernel(%arg0: i32, %arg1: i32, %arg2: i32, %arg3: memref<512x128xbf16, #tpu.memory_space<vmem>>, %arg4: memref<128x128xbf16, #tpu.memory_space<vmem>>, %arg5: memref<1x128xf32, #tpu.memory_space<vmem>>, %arg6: memref<512x128xbf16, #tpu.memory_space<vmem>>, %arg7: memref<512x128xf32, #tpu.memory_space<vmem>>) attributes {dimension_semantics = [#tpu.dimension_semantics<parallel>, #tpu.dimension_semantics<parallel>, #tpu.dimension_semantics<arbitrary>], iteration_bounds = array<i64: 2, 1, 1>, scalar_prefetch = 0 : i64, scratch_operands = 1 : i64, tpu.core_type = #tpu.core_type<tc>, window_params = [{transform_indices = @transform_0, window_bounds = array<i64: 512, 128>}, {transform_indices = @transform_1, window_bounds = array<i64: 128, 128>}, {transform_indices = @transform_2, window_bounds = array<i64: 1, 128>}, {transform_indices = @transform_3, window_bounds = array<i64: 512, 128>}]} {
    %c0_i32 = arith.constant 0 : i32
    %0 = arith.cmpi eq, %arg2, %c0_i32 : i32
    %1 = arith.extui %0 : i1 to i32
    %c0_i32_0 = arith.constant 0 : i32
    %2 = arith.cmpi ne, %1, %c0_i32_0 : i32
    scf.if %2 {
      %cst_10 = arith.constant 0.000000e+00 : f32
      %12 = vector.broadcast %cst_10 : f32 to vector<512x128xf32>
      %c0_11 = arith.constant 0 : index
      %c0_12 = arith.constant 0 : index
      %13 = vector.load %arg7[%c0_11, %c0_12] : memref<512x128xf32, #tpu.memory_space<vmem>>, vector<512x128xf32>
      tpu.vector_store %arg7[%c0_11, %c0_12], %12 {strides = array<i32>} : memref<512x128xf32, #tpu.memory_space<vmem>>, vector<512x128xf32>,
    } else {
    }
    %c0 = arith.constant 0 : index
    %c0_1 = arith.constant 0 : index
    %3 = vector.load %arg7[%c0, %c0_1] : memref<512x128xf32, #tpu.memory_space<vmem>>, vector<512x128xf32>
    %c0_2 = arith.constant 0 : index
    %c0_3 = arith.constant 0 : index
    %4 = vector.load %arg3[%c0_2, %c0_3] : memref<512x128xbf16, #tpu.memory_space<vmem>>, vector<512x128xbf16>
    %c0_4 = arith.constant 0 : index
    %c0_5 = arith.constant 0 : index
    %5 = vector.load %arg4[%c0_4, %c0_5] : memref<128x128xbf16, #tpu.memory_space<vmem>>, vector<128x128xbf16>
    %cst = arith.constant dense<0.000000e+00> : vector<512x128xf32>
    %6 = tpu.matmul %4, %5, %cst {dimension_numbers = #tpu.dot_dimension_numbers<[1], [0], [0], [1], [0, 0, 1, 1], [], []>} : vector<512x128xbf16>, vector<128x128xbf16>, vector<512x128xf32> -> vector<512x128xf32>
    %7 = arith.addf %3, %6 : vector<512x128xf32>
    %c0_6 = arith.constant 0 : index
    %c0_7 = arith.constant 0 : index
    %8 = vector.load %arg7[%c0_6, %c0_7] : memref<512x128xf32, #tpu.memory_space<vmem>>, vector<512x128xf32>
    tpu.vector_store %arg7[%c0_6, %c0_7], %7 {strides = array<i32>} : memref<512x128xf32, #tpu.memory_space<vmem>>, vector<512x128xf32>,
    %c0_i32_8 = arith.constant 0 : i32
    %9 = arith.cmpi eq, %arg2, %c0_i32_8 : i32
    %10 = arith.extui %9 : i1 to i32
    %c0_i32_9 = arith.constant 0 : i32
    %11 = arith.cmpi ne, %10, %c0_i32_9 : i32
    scf.if %11 {
      %c0_10 = arith.constant 0 : index
      %c0_11 = arith.constant 0 : index
      %12 = vector.load %arg7[%c0_10, %c0_11] : memref<512x128xf32, #tpu.memory_space<vmem>>, vector<512x128xf32>
      %c0_12 = arith.constant 0 : index
      %c0_13 = arith.constant 0 : index
      %13 = vector.load %arg5[%c0_12, %c0_13] : memref<1x128xf32, #tpu.memory_space<vmem>>, vector<1x128xf32>
      %14 = vector.broadcast %13 : vector<1x128xf32> to vector<512x128xf32>
      %15 = arith.addf %12, %14 : vector<512x128xf32>
      %cst_14 = arith.constant 0.000000e+00 : f32
      %16 = vector.broadcast %cst_14 : f32 to vector<512x128xf32>
      %17 = arith.cmpf oge, %15, %16 : vector<512x128xf32>
      %cst_15 = arith.constant 1.000000e-01 : f32
      %18 = vector.broadcast %cst_15 : f32 to vector<512x128xf32>
      %19 = arith.mulf %18, %15 : vector<512x128xf32>
      %20 = arith.select %17, %15, %19 : vector<512x128xi1>, vector<512x128xf32>
      %21 = arith.truncf %20 : vector<512x128xf32> to vector<512x128xbf16>
      %c0_16 = arith.constant 0 : index
      %c0_17 = arith.constant 0 : index
      %22 = vector.load %arg6[%c0_16, %c0_17] : memref<512x128xbf16, #tpu.memory_space<vmem>>, vector<512x128xbf16>
      tpu.vector_store %arg6[%c0_16, %c0_17], %21 {strides = array<i32>} : memref<512x128xbf16, #tpu.memory_space<vmem>>, vector<512x128xbf16>,
    } else {
    }
    return
  }
  func.func @transform_0(%arg0: i32, %arg1: i32, %arg2: i32) -> (i32, i32) {
    %c0_i32 = arith.constant 0 : i32
    return %arg0, %arg2 : i32, i32
  }
  func.func @transform_1(%arg0: i32, %arg1: i32, %arg2: i32) -> (i32, i32) {
    %c0_i32 = arith.constant 0 : i32
    return %arg2, %arg1 : i32, i32
  }
  func.func @transform_2(%arg0: i32, %arg1: i32, %arg2: i32) -> (i32, i32) {
    %c0_i32 = arith.constant 0 : i32
    %c0_i32_0 = arith.constant 0 : i32
    return %c0_i32, %arg1 : i32, i32
  }
  func.func @transform_3(%arg0: i32, %arg1: i32, %arg2: i32) -> (i32, i32) {
    %c0_i32 = arith.constant 0 : i32
    return %arg0, %arg1 : i32, i32
  }
}

</mosaic_0001>

<llo_original>
// kernel: tpu_custom_call.1
$region0: #{tpu_custom_call.1}
  #allocation0 [shape = 'u32[]', space=smem, size = 0x4, offset = 0x4, fixed_abs, tag = 'smem constant byte address 0x4 - core index']
  #allocation1 [shape = 'u32[144,128]{1,0:T(1,128)}', space=vmem, size = 0x12000, scoped, tag = 'internal scratch']
  #allocation2 [shape = 'f32[512,128]{1,0:T(8,128)}', space=vmem, size = 0x40000, scoped, tag = 'scratch operand']
  %s0 = inlined_call_operand.hbm [shape: bf16[1024,128], index: 0, kind: input, shape index: {}]
  %s1 = inlined_call_operand.hbm [shape: bf16[128,128], index: 1, kind: input, shape index: {}]
  %s2 = inlined_call_operand.vmem [shape: f32[1,128], index: 2, kind: input, shape index: {}]
  %s3 = inlined_call_operand.hbm [shape: bf16[1024,128], index: 3, kind: output, shape index: {}]
  %s4 = sld [smem:[#allocation0]]
  $region61: #{tpu_custom_call.1} parent=0
    _
  %s6 = ssub.s32 1, %s4
  %s7 = scalar_select 0, %s6, %s4
  $region1: #{tpu_custom_call.1} parent=0
    #allocation3 [shape = 'u8[262144]{0}', space=vmem, size = 0x40000, scoped, tag = 'input window, operand 0']
    #allocation4 [shape = 's32[2]{0}', space=sflag, size = 0x8, scoped, tag = 'scoped memory for tpu_custom_call.1']
    #allocation5 [shape = 's32[2]{0}', space=sflag, size = 0x8, scoped, tag = 'scoped memory for tpu_custom_call.1']
    #allocation6 [shape = 'u8[32768]{0}', space=vmem, size = 0x8000, scoped, tag = 'input window, operand 1, single buffered']
    #allocation7 [shape = 's32[1]{0}', space=sflag, size = 0x4, scoped, tag = 'scoped memory for tpu_custom_call.1']
    #allocation8 [shape = 'u8[262144]{0}', space=vmem, size = 0x40000, scoped, tag = 'output window, operand 0']
    %8 = vsyncpa [#allocation4], 0
    %s9 = scalar_lea.sflag [#allocation4], 1
    %10 = vsyncpa %s9, 0
    %11 = vsyncpa [#allocation7], 0
    %12 = vsyncpa [#allocation5], 0
    %s13 = scalar_lea.sflag [#allocation5], 1
    %14 = vsyncpa %s13, 0
    loop: start=0, step=1, limit=4
    $region2: #{tpu_custom_call.1} parent=1 // loop_pre_header
      _
    $region3: #{tpu_custom_call.1} parent=1 // loop_header
      %s16 = sphi 0, %s20
      %p17 = scmp.ge.s32.totalorder %s16, 4
      %s23 = sphi 0, %s42
      %s24 = sphi 0, %s38
      %s25 = sphi 0, %s34
      %s26 = sphi 0, %s23
      %s27 = sphi 0, %s24
      %s28 = sphi 0, %s25
      %s29 = sphi 0, %s26
      %s30 = sphi 0, %s27
      %s31 = sphi 0, %s28
      %s47 = sphi 0, %s49
      %s50 = sphi 0, %s47
      %s51 = sphi 0, %s50
      %s67 = sphi 0, %s51
      %s75 = sphi 0, %s77
      %s78 = sphi 0, %s75
      %s79 = sphi 0, %s78
      %s95 = sphi 0, %s79
      %s101 = sphi 0, %s103
      %s104 = sphi 0, %s101
      %s105 = sphi 0, %s104
      %s121 = sphi 0, %s105
      %s129 = sphi 0, %s131
      %s132 = sphi 0, %s129
      %s133 = sphi 0, %s132
      %s149 = sphi 0, %s133
    $region4: #{tpu_custom_call.1} parent=1 // loop_header_branch
      %19 = sbr.rel (%p17) target = $region8
    $region5: #{tpu_custom_call.1} parent=1 // loop_body
      %s21 = ssub.s32 %s16, 1
      %s22 = ssub.s32 %s16, 2
      %s32 = sadd.s32 1, %s25
      %p33 = scmp.ge.s32.totalorder %s32, 1
      %s34 = scalar_select %p33, 0, %s32
      %s35 = sadd.s32 1, %s24
      %s36 = scalar_select %p33, %s35, %s24
      %p37 = scmp.ge.s32.totalorder %s36, 1
      %s38 = scalar_select %p37, 0, %s36
      %s39 = sadd.s32 1, %s23
      %s40 = scalar_select %p37, %s39, %s23
      %p41 = scmp.ge.s32.totalorder %s40, 2
      %s42 = scalar_select %p41, 0, %s40
      %s43 = ssub.s32 %s23, %s42
      %s44 = ssub.s32 %s25, %s34
      %s45 = sor.u32 %s43, %s44
      %p46 = scmp.eq.s32.totalorder %s45, 0
      %s48 = sadd.s32 %s47, 1
      %s49 = scalar_select %p46, %s47, %s48
      %p52 = pneg %p46
      %p53 = scmp.eq.s32.totalorder %s16, 1
      %p54 = por %p52, %p53
      %p55 = scmp.ne.s32.totalorder %s47, %s50
      %p56 = scmp.eq.s32.totalorder %s16, 0
      %p57 = por %p55, %p56
      %p58 = scmp.ne.s32.totalorder %s47, %s50
      %p59 = scmp.eq.s32.totalorder %s21, 1
      %p60 = por %p58, %p59
      %p61 = scmp.ne.s32.totalorder %s50, %s51
      %p62 = scmp.eq.s32.totalorder %s21, 0
      %p63 = por %p61, %p62
      %p64 = scmp.ne.s32.totalorder %s50, %s51
      %p65 = scmp.eq.s32.totalorder %s22, 1
      %p66 = por %p64, %p65
      %p68 = scmp.ne.s32.totalorder %s51, %s67
      %p69 = scmp.eq.s32.totalorder %s22, 0
      %p70 = por %p68, %p69
      %s71 = ssub.s32 %s25, %s34
      %s72 = ssub.s32 %s24, %s38
      %s73 = sor.u32 %s71, %s72
      %p74 = scmp.eq.s32.totalorder %s73, 0
      %s76 = sadd.s32 %s75, 1
      %s77 = scalar_select %p74, %s75, %s76
      %p80 = pneg %p74
      %p81 = scmp.eq.s32.totalorder %s16, 1
      %p82 = por %p80, %p81
      %p83 = scmp.ne.s32.totalorder %s75, %s78
      %p84 = scmp.eq.s32.totalorder %s16, 0
      %p85 = por %p83, %p84
      %p86 = scmp.ne.s32.totalorder %s75, %s78
      %p87 = scmp.eq.s32.totalorder %s21, 1
      %p88 = por %p86, %p87
      %p89 = scmp.ne.s32.totalorder %s78, %s79
      %p90 = scmp.eq.s32.totalorder %s21, 0
      %p91 = por %p89, %p90
      %p92 = scmp.ne.s32.totalorder %s78, %s79
      %p93 = scmp.eq.s32.totalorder %s22, 1
      %p94 = por %p92, %p93
      %p96 = scmp.ne.s32.totalorder %s79, %s95
      %p97 = scmp.eq.s32.totalorder %s22, 0
      %p98 = por %p96, %p97
      %s99 = ssub.s32 %s24, %s38
      %p100 = scmp.eq.s32.totalorder %s99, 0
      %s102 = sadd.s32 %s101, 1
      %s103 = scalar_select %p100, %s101, %s102
      %p106 = pneg %p100
      %p107 = scmp.eq.s32.totalorder %s16, 1
      %p108 = por %p106, %p107
      %p109 = scmp.ne.s32.totalorder %s101, %s104
      %p110 = scmp.eq.s32.totalorder %s16, 0
      %p111 = por %p109, %p110
      %p112 = scmp.ne.s32.totalorder %s101, %s104
      %p113 = scmp.eq.s32.totalorder %s21, 1
      %p114 = por %p112, %p113
      %p115 = scmp.ne.s32.totalorder %s104, %s105
      %p116 = scmp.eq.s32.totalorder %s21, 0
      %p117 = por %p115, %p116
      %p118 = scmp.ne.s32.totalorder %s104, %s105
      %p119 = scmp.eq.s32.totalorder %s22, 1
      %p120 = por %p118, %p119
      %p122 = scmp.ne.s32.totalorder %s105, %s121
      %p123 = scmp.eq.s32.totalorder %s22, 0
      %p124 = por %p122, %p123
      %s125 = ssub.s32 %s23, %s42
      %s126 = ssub.s32 %s24, %s38
      %s127 = sor.u32 %s125, %s126
      %p128 = scmp.eq.s32.totalorder %s127, 0
      %s130 = sadd.s32 %s129, 1
      %s131 = scalar_select %p128, %s129, %s130
      %p134 = pneg %p128
      %p135 = scmp.eq.s32.totalorder %s16, 1
      %p136 = por %p134, %p135
      %p137 = scmp.ne.s32.totalorder %s129, %s132
      %p138 = scmp.eq.s32.totalorder %s16, 0
      %p139 = por %p137, %p138
      %p140 = scmp.ne.s32.totalorder %s129, %s132
      %p141 = scmp.eq.s32.totalorder %s21, 1
      %p142 = por %p140, %p141
      %p143 = scmp.ne.s32.totalorder %s132, %s133
      %p144 = scmp.eq.s32.totalorder %s21, 0
      %p145 = por %p143, %p144
      %p146 = scmp.ne.s32.totalorder %s132, %s133
      %p147 = scmp.eq.s32.totalorder %s22, 1
      %p148 = por %p146, %p147
      %p150 = scmp.ne.s32.totalorder %s133, %s149
      %p151 = scmp.eq.s32.totalorder %s22, 0
      %p152 = por %p150, %p151
      %p153 = scmp.le.s32.totalorder 1, %s16
      %p154 = scmp.lt.s32.totalorder %s16, 3
      %p155 = pnand %p153, %p154
      %p156 = pneg %p155
      // Predicated region
      $region9: #{tpu_custom_call.1} parent=5 // pred_check
        _
      $region10: #{tpu_custom_call.1} parent=5 // pred_check_branch
        %158 = sbr.rel (%p155) target = $region12
      $region11: #{tpu_custom_call.1} parent=5 // pred_region
        %s159 = ssub.s32 %s16, 1
        // Predicated region
        $region13: #{tpu_custom_call.1} parent=11 // pred_check
          %p160 = pneg %p91
        $region14: #{tpu_custom_call.1} parent=11 // pred_check_branch
          %162 = sbr.rel (%p160) target = $region16
        $region15: #{tpu_custom_call.1} parent=11 // pred_region
          %s163 = smul.u32 16, %s28
          %s165 = ssub.s32 1024, 1024
          %166 = vsyncadd [#allocation7], %s165
          %s167 = sadd.s32 %s27, %s163
          %s168 = smul.addr %s167, 64
          %s169 = scalar_lea.hbm %s1, %s168
          %s170 = sshll.u32 [#allocation6], 4
          %s171 = int_to_ptr.vmem [resolvable:$true] %s170
          %176 = dma.hbm_to_vmem [thread:$0]  %s169, 1024, %s171, [#allocation7], 64, 64, 4
        $region16: #{tpu_custom_call.1} parent=11 // pred_fallthru
          _
        // Predicated region
        $region17: #{tpu_custom_call.1} parent=11 // pred_check
          %p177 = pneg %p117
        $region18: #{tpu_custom_call.1} parent=11 // pred_check_branch
          %179 = sbr.rel (%p177) target = $region20
        $region19: #{tpu_custom_call.1} parent=11 // pred_region
          %p180 = scmp.lt.s32.totalorder %s27, 0
          %s181 = scalar_select %p180, %s27, 0
          %s182 = scalar_lea.vmem %s2, %s181
        $region20: #{tpu_custom_call.1} parent=11 // pred_fallthru
          _
      $region12: #{tpu_custom_call.1} parent=5 // pred_fallthru
        _
      %p183 = scmp.lt.s32.totalorder %s16, 2
      // Predicated region
      $region21: #{tpu_custom_call.1} parent=5 // pred_check
        %p184 = pneg %p183
      $region22: #{tpu_custom_call.1} parent=5 // pred_check_branch
        %186 = sbr.rel (%p184) target = $region24
      $region23: #{tpu_custom_call.1} parent=5 // pred_region
        // Predicated region
        $region25: #{tpu_custom_call.1} parent=23 // pred_check
          %p187 = pneg %p57
        $region26: #{tpu_custom_call.1} parent=23 // pred_check_branch
          %189 = sbr.rel (%p187) target = $region28
        $region27: #{tpu_custom_call.1} parent=23 // pred_region
          %s190 = sand.u32 %s47, 1
          %s191 = scalar_lea.sflag [#allocation4], %s190
          %s192 = sand.u32 %s47, 1
          %s193 = smul.addr %s192, 256
          %s194 = scalar_lea.vmem [#allocation3], %s193
          %s195 = smul.u32 64, %s23
          %s197 = ssub.s32 4096, 4096
          %198 = vsyncadd %s191, %s197
          %s199 = sadd.s32 %s25, %s195
          %s200 = smul.addr %s199, 64
          %s201 = scalar_lea.hbm %s0, %s200
          %s202 = sshll.u32 %s194, 4
          %s203 = int_to_ptr.vmem [resolvable:$true] %s202
          %208 = dma.hbm_to_vmem [thread:$0]  %s201, 4096, %s203, %s191, 64, 64, 4
        $region28: #{tpu_custom_call.1} parent=23 // pred_fallthru
          _
      $region24: #{tpu_custom_call.1} parent=5 // pred_fallthru
        _
      %p209 = scmp.le.s32.totalorder 1, %s16
      %p210 = scmp.lt.s32.totalorder %s16, 3
      %p211 = pnand %p209, %p210
      %p212 = pneg %p211
      // Predicated region
      $region29: #{tpu_custom_call.1} parent=5 // pred_check
        _
      $region30: #{tpu_custom_call.1} parent=5 // pred_check_branch
        %214 = sbr.rel (%p211) target = $region32
      $region31: #{tpu_custom_call.1} parent=5 // pred_region
        %s215 = ssub.s32 %s16, 1
        %s216 = sand.u32 %s50, 1
        %s217 = scalar_lea.sflag [#allocation4], %s216
        %s218 = sand.u32 %s50, 1
        %s219 = smul.addr %s218, 256
        %s220 = scalar_lea.vmem [#allocation3], %s219
        // Predicated region
        $region33: #{tpu_custom_call.1} parent=31 // pred_check
          %p221 = pneg %p63
        $region34: #{tpu_custom_call.1} parent=31 // pred_check_branch
          %223 = sbr.rel (%p221) target = $region36
        $region35: #{tpu_custom_call.1} parent=31 // pred_region
          %224 = dma.done %s217, 4096
        $region36: #{tpu_custom_call.1} parent=31 // pred_fallthru
          _
        // Predicated region
        $region37: #{tpu_custom_call.1} parent=31 // pred_check
          %p225 = pneg %p91
        $region38: #{tpu_custom_call.1} parent=31 // pred_check_branch
          %227 = sbr.rel (%p225) target = $region40
        $region39: #{tpu_custom_call.1} parent=31 // pred_region
          %228 = dma.done [#allocation7], 1024
        $region40: #{tpu_custom_call.1} parent=31 // pred_fallthru
          _
        %s229 = sand.u32 %s50, 1
        %s230 = scalar_lea.sflag [#allocation4], %s229
        %s231 = sand.u32 %s50, 1
        %s232 = smul.addr %s231, 256
        %s233 = scalar_lea.vmem [#allocation3], %s232
        %p234 = pneg %p63
        %p235 = pneg %p60
        %p236 = pneg %p91
        %p237 = pneg %p88
        %p238 = scmp.lt.s32.totalorder %s27, 0
        %s239 = scalar_select %p238, %s27, 0
        %s240 = scalar_lea.vmem %s2, %s239
        %p241 = pneg %p117
        %p242 = pneg %p114
        %p243 = pneg %p145
        %p244 = pneg %p142
        %s245 = sand.u32 %s132, 1
        %s246 = scalar_lea.sflag [#allocation5], %s245
        %s247 = sand.u32 %s132, 1
        %s248 = smul.addr %s247, 256
        %s249 = scalar_lea.vmem [#allocation8], %s248
        %s250 = smul.u32 64, %s26
        %s251 = smul.u32 16, %s28
        %p252 = scmp.lt.s32.totalorder %s27, 0
        %s253 = scalar_select %p252, %s27, 0
        %s254 = scalar_lea.vmem %s2, %s253
        %s255 = smul.u32 64, %s26
        %p257 = scmp.eq.s32.totalorder %s28, 0
        // Predicated region
        $region41: #{tpu_custom_call.1} parent=31 // pred_check
          %p258 = pneg %p257
        $region42: #{tpu_custom_call.1} parent=31 // pred_check_branch
          %260 = sbr.rel (%p258) target = $region44
        $region43: #{tpu_custom_call.1} parent=31 // pred_region
          %261 = vst [vmem:[#allocation2] sm:$0xff] 0.0
          %262 = vst [vmem:[#allocation2 + $0x8] sm:$0xff] 0.0
          %263 = vst [vmem:[#allocation2 + $0x10] sm:$0xff] 0.0
          %264 = vst [vmem:[#allocation2 + $0x18] sm:$0xff] 0.0
          %265 = vst [vmem:[#allocation2 + $0x20] sm:$0xff] 0.0
          %266 = vst [vmem:[#allocation2 + $0x28] sm:$0xff] 0.0
          %267 = vst [vmem:[#allocation2 + $0x30] sm:$0xff] 0.0
          %268 = vst [vmem:[#allocation2 + $0x38] sm:$0xff] 0.0
          %269 = vst [vmem:[#allocation2 + $0x40] sm:$0xff] 0.0
          %270 = vst [vmem:[#allocation2 + $0x48] sm:$0xff] 0.0
          %271 = vst [vmem:[#allocation2 + $0x50] sm:$0xff] 0.0
          %272 = vst [vmem:[#allocation2 + $0x58] sm:$0xff] 0.0
          %273 = vst [vmem:[#allocation2 + $0x60] sm:$0xff] 0.0
          %274 = vst [vmem:[#allocation2 + $0x68] sm:$0xff] 0.0
          %275 = vst [vmem:[#allocation2 + $0x70] sm:$0xff] 0.0
          %276 = vst [vmem:[#allocation2 + $0x78] sm:$0xff] 0.0
          %277 = vst [vmem:[#allocation2 + $0x80] sm:$0xff] 0.0
          %278 = vst [vmem:[#allocation2 + $0x88] sm:$0xff] 0.0
          %279 = vst [vmem:[#allocation2 + $0x90] sm:$0xff] 0.0
          %280 = vst [vmem:[#allocation2 + $0x98] sm:$0xff] 0.0
          %281 = vst [vmem:[#allocation2 + $0xa0] sm:$0xff] 0.0
          %282 = vst [vmem:[#allocation2 + $0xa8] sm:$0xff] 0.0
          %283 = vst [vmem:[#allocation2 + $0xb0] sm:$0xff] 0.0
          %284 = vst [vmem:[#allocation2 + $0xb8] sm:$0xff] 0.0
          %285 = vst [vmem:[#allocation2 + $0xc0] sm:$0xff] 0.0
          %286 = vst [vmem:[#allocation2 + $0xc8] sm:$0xff] 0.0
          %287 = vst [vmem:[#allocation2 + $0xd0] sm:$0xff] 0.0
          %288 = vst [vmem:[#allocation2 + $0xd8] sm:$0xff] 0.0
          %289 = vst [vmem:[#allocation2 + $0xe0] sm:$0xff] 0.0
          %290 = vst [vmem:[#allocation2 + $0xe8] sm:$0xff] 0.0
          %291 = vst [vmem:[#allocation2 + $0xf0] sm:$0xff] 0.0
          %292 = vst [vmem:[#allocation2 + $0xf8] sm:$0xff] 0.0
          %293 = vst [vmem:[#allocation2 + $0x100] sm:$0xff] 0.0
          %294 = vst [vmem:[#allocation2 + $0x108] sm:$0xff] 0.0
          %295 = vst [vmem:[#allocation2 + $0x110] sm:$0xff] 0.0
          %296 = vst [vmem:[#allocation2 + $0x118] sm:$0xff] 0.0
          %297 = vst [vmem:[#allocation2 + $0x120] sm:$0xff] 0.0
          %298 = vst [vmem:[#allocation2 + $0x128] sm:$0xff] 0.0
          %299 = vst [vmem:[#allocation2 + $0x130] sm:$0xff] 0.0
          %300 = vst [vmem:[#allocation2 + $0x138] sm:$0xff] 0.0
          %301 = vst [vmem:[#allocation2 + $0x140] sm:$0xff] 0.0
          %302 = vst [vmem:[#allocation2 + $0x148] sm:$0xff] 0.0
          %303 = vst [vmem:[#allocation2 + $0x150] sm:$0xff] 0.0
          %304 = vst [vmem:[#allocation2 + $0x158] sm:$0xff] 0.0
          %305 = vst [vmem:[#allocation2 + $0x160] sm:$0xff] 0.0
          %306 = vst [vmem:[#allocation2 + $0x168] sm:$0xff] 0.0
          %307 = vst [vmem:[#allocation2 + $0x170] sm:$0xff] 0.0
          %308 = vst [vmem:[#allocation2 + $0x178] sm:$0xff] 0.0
          %309 = vst [vmem:[#allocation2 + $0x180] sm:$0xff] 0.0
          %310 = vst [vmem:[#allocation2 + $0x188] sm:$0xff] 0.0
          %311 = vst [vmem:[#allocation2 + $0x190] sm:$0xff] 0.0
          %312 = vst [vmem:[#allocation2 + $0x198] sm:$0xff] 0.0
          %313 = vst [vmem:[#allocation2 + $0x1a0] sm:$0xff] 0.0
          %314 = vst [vmem:[#allocation2 + $0x1a8] sm:$0xff] 0.0
          %315 = vst [vmem:[#allocation2 + $0x1b0] sm:$0xff] 0.0
          %316 = vst [vmem:[#allocation2 + $0x1b8] sm:$0xff] 0.0
          %317 = vst [vmem:[#allocation2 + $0x1c0] sm:$0xff] 0.0
          %318 = vst [vmem:[#allocation2 + $0x1c8] sm:$0xff] 0.0
          %319 = vst [vmem:[#allocation2 + $0x1d0] sm:$0xff] 0.0
          %320 = vst [vmem:[#allocation2 + $0x1d8] sm:$0xff] 0.0
          %321 = vst [vmem:[#allocation2 + $0x1e0] sm:$0xff] 0.0
          %322 = vst [vmem:[#allocation2 + $0x1e8] sm:$0xff] 0.0
          %323 = vst [vmem:[#allocation2 + $0x1f0] sm:$0xff] 0.0
          %324 = vst [vmem:[#allocation2 + $0x1f8] sm:$0xff] 0.0
        $region44: #{tpu_custom_call.1} parent=31 // pred_fallthru
          _
        %v325 = vld [vmem:[#allocation2] sm:$0xff]
        %v326 = vld [vmem:[#allocation2 + $0x8] sm:$0xff]
        %v327 = vld [vmem:[#allocation2 + $0x10] sm:$0xff]
        %v328 = vld [vmem:[#allocation2 + $0x18] sm:$0xff]
        %v329 = vld [vmem:[#allocation2 + $0x20] sm:$0xff]
        %v330 = vld [vmem:[#allocation2 + $0x28] sm:$0xff]
        %v331 = vld [vmem:[#allocation2 + $0x30] sm:$0xff]
        %v332 = vld [vmem:[#allocation2 + $0x38] sm:$0xff]
        %v333 = vld [vmem:[#allocation2 + $0x40] sm:$0xff]
        %v334 = vld [vmem:[#allocation2 + $0x48] sm:$0xff]
        %v335 = vld [vmem:[#allocation2 + $0x50] sm:$0xff]
        %v336 = vld [vmem:[#allocation2 + $0x58] sm:$0xff]
        %v337 = vld [vmem:[#allocation2 + $0x60] sm:$0xff]
        %v338 = vld [vmem:[#allocation2 + $0x68] sm:$0xff]
        %v339 = vld [vmem:[#allocation2 + $0x70] sm:$0xff]
        %v340 = vld [vmem:[#allocation2 + $0x78] sm:$0xff]
        %v341 = vld [vmem:[#allocation2 + $0x80] sm:$0xff]
        %v342 = vld [vmem:[#allocation2 + $0x88] sm:$0xff]
        %v343 = vld [vmem:[#allocation2 + $0x90] sm:$0xff]
        %v344 = vld [vmem:[#allocation2 + $0x98] sm:$0xff]
        %v345 = vld [vmem:[#allocation2 + $0xa0] sm:$0xff]
        %v346 = vld [vmem:[#allocation2 + $0xa8] sm:$0xff]
        %v347 = vld [vmem:[#allocation2 + $0xb0] sm:$0xff]
        %v348 = vld [vmem:[#allocation2 + $0xb8] sm:$0xff]
        %v349 = vld [vmem:[#allocation2 + $0xc0] sm:$0xff]
        %v350 = vld [vmem:[#allocation2 + $0xc8] sm:$0xff]
        %v351 = vld [vmem:[#allocation2 + $0xd0] sm:$0xff]
        %v352 = vld [vmem:[#allocation2 + $0xd8] sm:$0xff]
        %v353 = vld [vmem:[#allocation2 + $0xe0] sm:$0xff]
        %v354 = vld [vmem:[#allocation2 + $0xe8] sm:$0xff]
        %v355 = vld [vmem:[#allocation2 + $0xf0] sm:$0xff]
        %v356 = vld [vmem:[#allocation2 + $0xf8] sm:$0xff]
        %v357 = vld [vmem:[#allocation2 + $0x100] sm:$0xff]
        %v358 = vld [vmem:[#allocation2 + $0x108] sm:$0xff]
        %v359 = vld [vmem:[#allocation2 + $0x110] sm:$0xff]
        %v360 = vld [vmem:[#allocation2 + $0x118] sm:$0xff]
        %v361 = vld [vmem:[#allocation2 + $0x120] sm:$0xff]
        %v362 = vld [vmem:[#allocation2 + $0x128] sm:$0xff]
        %v363 = vld [vmem:[#allocation2 + $0x130] sm:$0xff]
        %v364 = vld [vmem:[#allocation2 + $0x138] sm:$0xff]
        %v365 = vld [vmem:[#allocation2 + $0x140] sm:$0xff]
        %v366 = vld [vmem:[#allocation2 + $0x148] sm:$0xff]
        %v367 = vld [vmem:[#allocation2 + $0x150] sm:$0xff]
        %v368 = vld [vmem:[#allocation2 + $0x158] sm:$0xff]
        %v369 = vld [vmem:[#allocation2 + $0x160] sm:$0xff]
        %v370 = vld [vmem:[#allocation2 + $0x168] sm:$0xff]
        %v371 = vld [vmem:[#allocation2 + $0x170] sm:$0xff]
        %v372 = vld [vmem:[#allocation2 + $0x178] sm:$0xff]
        %v373 = vld [vmem:[#allocation2 + $0x180] sm:$0xff]
        %v374 = vld [vmem:[#allocation2 + $0x188] sm:$0xff]
        %v375 = vld [vmem:[#allocation2 + $0x190] sm:$0xff]
        %v376 = vld [vmem:[#allocation2 + $0x198] sm:$0xff]
        %v377 = vld [vmem:[#allocation2 + $0x1a0] sm:$0xff]
        %v378 = vld [vmem:[#allocation2 + $0x1a8] sm:$0xff]
        %v379 = vld [vmem:[#allocation2 + $0x1b0] sm:$0xff]
        %v380 = vld [vmem:[#allocation2 + $0x1b8] sm:$0xff]
        %v381 = vld [vmem:[#allocation2 + $0x1c0] sm:$0xff]
        %v382 = vld [vmem:[#allocation2 + $0x1c8] sm:$0xff]
        %v383 = vld [vmem:[#allocation2 + $0x1d0] sm:$0xff]
        %v384 = vld [vmem:[#allocation2 + $0x1d8] sm:$0xff]
        %v385 = vld [vmem:[#allocation2 + $0x1e0] sm:$0xff]
        %v386 = vld [vmem:[#allocation2 + $0x1e8] sm:$0xff]
        %v387 = vld [vmem:[#allocation2 + $0x1f0] sm:$0xff]
        %v388 = vld [vmem:[#allocation2 + $0x1f8] sm:$0xff]
        %v389 = vld [vmem:[%s220] sm:$0xf]
        %v390 = vld [vmem:[%s220 + $0x4] sm:$0xf]
        %v391 = vld [vmem:[%s220 + $0x8] sm:$0xf]
        %v392 = vld [vmem:[%s220 + $0xc] sm:$0xf]
        %v393 = vld [vmem:[%s220 + $0x10] sm:$0xf]
        %v394 = vld [vmem:[%s220 + $0x14] sm:$0xf]
        %v395 = vld [vmem:[%s220 + $0x18] sm:$0xf]
        %v396 = vld [vmem:[%s220 + $0x1c] sm:$0xf]
        %v397 = vld [vmem:[%s220 + $0x20] sm:$0xf]
        %v398 = vld [vmem:[%s220 + $0x24] sm:$0xf]
        %v399 = vld [vmem:[%s220 + $0x28] sm:$0xf]
        %v400 = vld [vmem:[%s220 + $0x2c] sm:$0xf]
        %v401 = vld [vmem:[%s220 + $0x30] sm:$0xf]
        %v402 = vld [vmem:[%s220 + $0x34] sm:$0xf]
        %v403 = vld [vmem:[%s220 + $0x38] sm:$0xf]
        %v404 = vld [vmem:[%s220 + $0x3c] sm:$0xf]
        %v405 = vld [vmem:[%s220 + $0x40] sm:$0xf]
        %v406 = vld [vmem:[%s220 + $0x44] sm:$0xf]
        %v407 = vld [vmem:[%s220 + $0x48] sm:$0xf]
        %v408 = vld [vmem:[%s220 + $0x4c] sm:$0xf]
        %v409 = vld [vmem:[%s220 + $0x50] sm:$0xf]
        %v410 = vld [vmem:[%s220 + $0x54] sm:$0xf]
        %v411 = vld [vmem:[%s220 + $0x58] sm:$0xf]
        %v412 = vld [vmem:[%s220 + $0x5c] sm:$0xf]
        %v413 = vld [vmem:[%s220 + $0x60] sm:$0xf]
        %v414 = vld [vmem:[%s220 + $0x64] sm:$0xf]
        %v415 = vld [vmem:[%s220 + $0x68] sm:$0xf]
        %v416 = vld [vmem:[%s220 + $0x6c] sm:$0xf]
        %v417 = vld [vmem:[%s220 + $0x70] sm:$0xf]
        %v418 = vld [vmem:[%s220 + $0x74] sm:$0xf]
        %v419 = vld [vmem:[%s220 + $0x78] sm:$0xf]
        %v420 = vld [vmem:[%s220 + $0x7c] sm:$0xf]
        %v421 = vld [vmem:[%s220 + $0x80] sm:$0xf]
        %v422 = vld [vmem:[%s220 + $0x84] sm:$0xf]
        %v423 = vld [vmem:[%s220 + $0x88] sm:$0xf]
        %v424 = vld [vmem:[%s220 + $0x8c] sm:$0xf]
        %v425 = vld [vmem:[%s220 + $0x90] sm:$0xf]
        %v426 = vld [vmem:[%s220 + $0x94] sm:$0xf]
        %v427 = vld [vmem:[%s220 + $0x98] sm:$0xf]
        %v428 = vld [vmem:[%s220 + $0x9c] sm:$0xf]
        %v429 = vld [vmem:[%s220 + $0xa0] sm:$0xf]
        %v430 = vld [vmem:[%s220 + $0xa4] sm:$0xf]
        %v431 = vld [vmem:[%s220 + $0xa8] sm:$0xf]
        %v432 = vld [vmem:[%s220 + $0xac] sm:$0xf]
        %v433 = vld [vmem:[%s220 + $0xb0] sm:$0xf]
        %v434 = vld [vmem:[%s220 + $0xb4] sm:$0xf]
        %v435 = vld [vmem:[%s220 + $0xb8] sm:$0xf]
        %v436 = vld [vmem:[%s220 + $0xbc] sm:$0xf]
        %v437 = vld [vmem:[%s220 + $0xc0] sm:$0xf]
        %v438 = vld [vmem:[%s220 + $0xc4] sm:$0xf]
        %v439 = vld [vmem:[%s220 + $0xc8] sm:$0xf]
        %v440 = vld [vmem:[%s220 + $0xcc] sm:$0xf]
        %v441 = vld [vmem:[%s220 + $0xd0] sm:$0xf]
        %v442 = vld [vmem:[%s220 + $0xd4] sm:$0xf]
        %v443 = vld [vmem:[%s220 + $0xd8] sm:$0xf]
        %v444 = vld [vmem:[%s220 + $0xdc] sm:$0xf]
        %v445 = vld [vmem:[%s220 + $0xe0] sm:$0xf]
        %v446 = vld [vmem:[%s220 + $0xe4] sm:$0xf]
        %v447 = vld [vmem:[%s220 + $0xe8] sm:$0xf]
        %v448 = vld [vmem:[%s220 + $0xec] sm:$0xf]
        %v449 = vld [vmem:[%s220 + $0xf0] sm:$0xf]
        %v450 = vld [vmem:[%s220 + $0xf4] sm:$0xf]
        %v451 = vld [vmem:[%s220 + $0xf8] sm:$0xf]
        %v452 = vld [vmem:[%s220 + $0xfc] sm:$0xf]
        %v453 = vld [vmem:[#allocation6] sm:$0xf]
        %v454 = vld [vmem:[#allocation6 + $0x4] sm:$0xf]
        %v455 = vld [vmem:[#allocation6 + $0x8] sm:$0xf]
        %v456 = vld [vmem:[#allocation6 + $0xc] sm:$0xf]
        %v457 = vld [vmem:[#allocation6 + $0x10] sm:$0xf]
        %v458 = vld [vmem:[#allocation6 + $0x14] sm:$0xf]
        %v459 = vld [vmem:[#allocation6 + $0x18] sm:$0xf]
        %v460 = vld [vmem:[#allocation6 + $0x1c] sm:$0xf]
        %v461 = vld [vmem:[#allocation6 + $0x20] sm:$0xf]
        %v462 = vld [vmem:[#allocation6 + $0x24] sm:$0xf]
        %v463 = vld [vmem:[#allocation6 + $0x28] sm:$0xf]
        %v464 = vld [vmem:[#allocation6 + $0x2c] sm:$0xf]
        %v465 = vld [vmem:[#allocation6 + $0x30] sm:$0xf]
        %v466 = vld [vmem:[#allocation6 + $0x34] sm:$0xf]
        %v467 = vld [vmem:[#allocation6 + $0x38] sm:$0xf]
        %v468 = vld [vmem:[#allocation6 + $0x3c] sm:$0xf]
        %v533 = vunpack.c.l.b16 %v389
        %v534 = vunpack.c.l.b16 %v390
        %v535 = vunpack.c.l.b16 %v391
        %v536 = vunpack.c.l.b16 %v392
        %v537 = vunpack.c.l.b16 %v393
        %v538 = vunpack.c.l.b16 %v394
        %v539 = vunpack.c.l.b16 %v395
        %v540 = vunpack.c.l.b16 %v396
        %v541 = vunpack.c.l.b16 %v397
        %v542 = vunpack.c.l.b16 %v398
        %v543 = vunpack.c.l.b16 %v399
        %v544 = vunpack.c.l.b16 %v400
        %v545 = vunpack.c.l.b16 %v401
        %v546 = vunpack.c.l.b16 %v402
        %v547 = vunpack.c.l.b16 %v403
        %v548 = vunpack.c.l.b16 %v404
        %v549 = vunpack.c.l.b16 %v405
        %v550 = vunpack.c.l.b16 %v406
        %v551 = vunpack.c.l.b16 %v407
        %v552 = vunpack.c.l.b16 %v408
        %v553 = vunpack.c.l.b16 %v409
        %v554 = vunpack.c.l.b16 %v410
        %v555 = vunpack.c.l.b16 %v411
        %v556 = vunpack.c.l.b16 %v412
        %v557 = vunpack.c.l.b16 %v413
        %v558 = vunpack.c.l.b16 %v414
        %v559 = vunpack.c.l.b16 %v415
        %v560 = vunpack.c.l.b16 %v416
        %v561 = vunpack.c.l.b16 %v417
        %v562 = vunpack.c.l.b16 %v418
        %v563 = vunpack.c.l.b16 %v419
        %v564 = vunpack.c.l.b16 %v420
        %v565 = vunpack.c.l.b16 %v421
        %v566 = vunpack.c.l.b16 %v422
        %v567 = vunpack.c.l.b16 %v423
        %v568 = vunpack.c.l.b16 %v424
        %v569 = vunpack.c.l.b16 %v425
        %v570 = vunpack.c.l.b16 %v426
        %v571 = vunpack.c.l.b16 %v427
        %v572 = vunpack.c.l.b16 %v428
        %v573 = vunpack.c.l.b16 %v429
        %v574 = vunpack.c.l.b16 %v430
        %v575 = vunpack.c.l.b16 %v431
        %v576 = vunpack.c.l.b16 %v432
        %v577 = vunpack.c.l.b16 %v433
        %v578 = vunpack.c.l.b16 %v434
        %v579 = vunpack.c.l.b16 %v435
        %v580 = vunpack.c.l.b16 %v436
        %v581 = vunpack.c.l.b16 %v437
        %v582 = vunpack.c.l.b16 %v438
        %v583 = vunpack.c.l.b16 %v439
        %v584 = vunpack.c.l.b16 %v440
        %v585 = vunpack.c.l.b16 %v441
        %v586 = vunpack.c.l.b16 %v442
        %v587 = vunpack.c.l.b16 %v443
        %v588 = vunpack.c.l.b16 %v444
        %v589 = vunpack.c.l.b16 %v445
        %v590 = vunpack.c.l.b16 %v446
        %v591 = vunpack.c.l.b16 %v447
        %v592 = vunpack.c.l.b16 %v448
        %v593 = vunpack.c.l.b16 %v449
        %v594 = vunpack.c.l.b16 %v450
        %v595 = vunpack.c.l.b16 %v451
        %v596 = vunpack.c.l.b16 %v452
        %v597 = vpack.c.b16 %v534, %v533
        %v598 = vpack.c.b16 %v536, %v535
        %v599 = vpack.c.b16 %v538, %v537
        %v600 = vpack.c.b16 %v540, %v539
        %v601 = vpack.c.b16 %v542, %v541
        %v602 = vpack.c.b16 %v544, %v543
        %v603 = vpack.c.b16 %v546, %v545
        %v604 = vpack.c.b16 %v548, %v547
        %v605 = vpack.c.b16 %v550, %v549
        %v606 = vpack.c.b16 %v552, %v551
        %v607 = vpack.c.b16 %v554, %v553
        %v608 = vpack.c.b16 %v556, %v555
        %v609 = vpack.c.b16 %v558, %v557
        %v610 = vpack.c.b16 %v560, %v559
        %v611 = vpack.c.b16 %v562, %v561
        %v612 = vpack.c.b16 %v564, %v563
        %v613 = vpack.c.b16 %v566, %v565
        %v614 = vpack.c.b16 %v568, %v567
        %v615 = vpack.c.b16 %v570, %v569
        %v616 = vpack.c.b16 %v572, %v571
        %v617 = vpack.c.b16 %v574, %v573
        %v618 = vpack.c.b16 %v576, %v575
        %v619 = vpack.c.b16 %v578, %v577
        %v620 = vpack.c.b16 %v580, %v579
        %v621 = vpack.c.b16 %v582, %v581
        %v622 = vpack.c.b16 %v584, %v583
        %v623 = vpack.c.b16 %v586, %v585
        %v624 = vpack.c.b16 %v588, %v587
        %v625 = vpack.c.b16 %v590, %v589
        %v626 = vpack.c.b16 %v592, %v591
        %v627 = vpack.c.b16 %v594, %v593
        %v628 = vpack.c.b16 %v596, %v595
        %v677 = vunpack.c.l.b16 %v453
        %v678 = vunpack.c.l.b16 %v454
        %v679 = vunpack.c.l.b16 %v455
        %v680 = vunpack.c.l.b16 %v456
        %v681 = vunpack.c.l.b16 %v457
        %v682 = vunpack.c.l.b16 %v458
        %v683 = vunpack.c.l.b16 %v459
        %v684 = vunpack.c.l.b16 %v460
        %v685 = vunpack.c.l.b16 %v461
        %v686 = vunpack.c.l.b16 %v462
        %v687 = vunpack.c.l.b16 %v463
        %v688 = vunpack.c.l.b16 %v464
        %v689 = vunpack.c.l.b16 %v465
        %v690 = vunpack.c.l.b16 %v466
        %v691 = vunpack.c.l.b16 %v467
        %v692 = vunpack.c.l.b16 %v468
        %v693 = vpack.c.b16 %v678, %v677
        %v694 = vpack.c.b16 %v680, %v679
        %v695 = vpack.c.b16 %v682, %v681
        %v696 = vpack.c.b16 %v684, %v683
        %v697 = vpack.c.b16 %v686, %v685
        %v698 = vpack.c.b16 %v688, %v687
        %v699 = vpack.c.b16 %v690, %v689
        %v700 = vpack.c.b16 %v692, %v691
        %709 = vmatprep.subr.bf16.mxu0 0
        %710 = vmatpush1.bf16.msra.mxu0 %v693
        %711 = vmatprep.subr.bf16.mxu0 0
        %712 = vmatpush1.bf16.msra.mxu0 %v694
        %713 = vmatprep.subr.bf16.mxu0 0
        %714 = vmatpush1.bf16.msra.mxu0 %v695
        %715 = vmatprep.subr.bf16.mxu0 0
        %716 = vmatpush1.bf16.msra.mxu0 %v696
        %717 = vmatprep.subr.bf16.mxu0 0
        %718 = vmatpush1.bf16.msra.mxu0 %v697
        %719 = vmatprep.subr.bf16.mxu0 0
        %720 = vmatpush1.bf16.msra.mxu0 %v698
        %721 = vmatprep.subr.bf16.mxu0 0
        %722 = vmatpush1.bf16.msra.mxu0 %v699
        %723 = vmatprep.subr.bf16.mxu0 0
        %724 = vmatpush1.bf16.msra.mxu0 %v700
        %725 = vmatprep.subr.bf16.mxu0 0
        %726 = vmatpush1.bf16.msra.mxu0 0
        %727 = vmatprep.subr.bf16.mxu0 0
        %728 = vmatpush1.bf16.msra.mxu0 0
        %729 = vmatprep.subr.bf16.mxu0 0
        %730 = vmatpush1.bf16.msra.mxu0 0
        %731 = vmatprep.subr.bf16.mxu0 0
        %732 = vmatpush1.bf16.msra.mxu0 0
        %733 = vmatprep.subr.bf16.mxu0 0
        %734 = vmatpush1.bf16.msra.mxu0 0
        %735 = vmatprep.subr.bf16.mxu0 0
        %736 = vmatpush1.bf16.msra.mxu0 0
        %737 = vmatprep.subr.bf16.mxu0 0
        %738 = vmatpush1.bf16.msra.mxu0 0
        %739 = vmatprep.subr.bf16.mxu0 0
        %740 = vmatpush1.bf16.msra.mxu0 0
        %741 = vmatprep.mubr.bf16.mxu0 0
        %742 = vmatmul.mubr.bf16.gmra.mrb[0].mxu0 %v597
        %v743 = vpop.f32.mrb[0].mxu0
        %v744 = vadd.f32 0.0, %v743
        %v745 = vpop.f32.mrb[0].mxu0
        %v746 = vpop.f32.mrb[0].mxu0
        %v747 = vadd.f32 0.0, %v746
        %v748 = vpop.f32.mrb[0].mxu0
        %749 = vmatprep.mubr.bf16.mxu0 0
        %750 = vmatmul.mubr.bf16.gmra.mrb[0].mxu0 %v598
        %v751 = vpop.f32.mrb[0].mxu0
        %v752 = vadd.f32 0.0, %v751
        %v753 = vpop.f32.mrb[0].mxu0
        %v754 = vpop.f32.mrb[0].mxu0
        %v755 = vadd.f32 0.0, %v754
        %v756 = vpop.f32.mrb[0].mxu0
        %757 = vmatprep.mubr.bf16.mxu0 0
        %758 = vmatmul.mubr.bf16.gmra.mrb[0].mxu0 %v599
        %v759 = vpop.f32.mrb[0].mxu0
        %v760 = vadd.f32 0.0, %v759
        %v761 = vpop.f32.mrb[0].mxu0
        %v762 = vpop.f32.mrb[0].mxu0
        %v763 = vadd.f32 0.0, %v762
        %v764 = vpop.f32.mrb[0].mxu0
        %765 = vmatprep.mubr.bf16.mxu0 0
        %766 = vmatmul.mubr.bf16.gmra.mrb[0].mxu0 %v600
        %v767 = vpop.f32.mrb[0].mxu0
        %v768 = vadd.f32 0.0, %v767
        %v769 = vpop.f32.mrb[0].mxu0
        %v770 = vpop.f32.mrb[0].mxu0
        %v771 = vadd.f32 0.0, %v770
        %v772 = vpop.f32.mrb[0].mxu0
        %773 = vmatprep.mubr.bf16.mxu0 0
        %774 = vmatmul.mubr.bf16.gmra.mrb[0].mxu0 %v601
        %v775 = vpop.f32.mrb[0].mxu0
        %v776 = vadd.f32 0.0, %v775
        %v777 = vpop.f32.mrb[0].mxu0
        %v778 = vpop.f32.mrb[0].mxu0
        %v779 = vadd.f32 0.0, %v778
        %v780 = vpop.f32.mrb[0].mxu0
        %781 = vmatprep.mubr.bf16.mxu0 0
        %782 = vmatmul.mubr.bf16.gmra.mrb[0].mxu0 %v602
        %v783 = vpop.f32.mrb[0].mxu0
        %v784 = vadd.f32 0.0, %v783
        %v785 = vpop.f32.mrb[0].mxu0
        %v786 = vpop.f32.mrb[0].mxu0
        %v787 = vadd.f32 0.0, %v786
        %v788 = vpop.f32.mrb[0].mxu0
        %789 = vmatprep.mubr.bf16.mxu0 0
        %790 = vmatmul.mubr.bf16.gmra.mrb[0].mxu0 %v603
        %v791 = vpop.f32.mrb[0].mxu0
        %v792 = vadd.f32 0.0, %v791
        %v793 = vpop.f32.mrb[0].mxu0
        %v794 = vpop.f32.mrb[0].mxu0
        %v795 = vadd.f32 0.0, %v794
        %v796 = vpop.f32.mrb[0].mxu0
        %797 = vmatprep.mubr.bf16.mxu0 0
        %798 = vmatmul.mubr.bf16.gmra.mrb[0].mxu0 %v604
        %v799 = vpop.f32.mrb[0].mxu0
        %v800 = vadd.f32 0.0, %v799
        %v801 = vpop.f32.mrb[0].mxu0
        %v802 = vpop.f32.mrb[0].mxu0
        %v803 = vadd.f32 0.0, %v802
        %v804 = vpop.f32.mrb[0].mxu0
        %805 = vmatprep.mubr.bf16.mxu0 0
        %806 = vmatmul.mubr.bf16.gmra.mrb[0].mxu0 %v605
        %v807 = vpop.f32.mrb[0].mxu0
        %v808 = vadd.f32 0.0, %v807
        %v809 = vpop.f32.mrb[0].mxu0
        %v810 = vpop.f32.mrb[0].mxu0
        %v811 = vadd.f32 0.0, %v810
        %v812 = vpop.f32.mrb[0].mxu0
        %813 = vmatprep.mubr.bf16.mxu0 0
        %814 = vmatmul.mubr.bf16.gmra.mrb[0].mxu0 %v606
        %v815 = vpop.f32.mrb[0].mxu0
        %v816 = vadd.f32 0.0, %v815
        %v817 = vpop.f32.mrb[0].mxu0
        %v818 = vpop.f32.mrb[0].mxu0
        %v819 = vadd.f32 0.0, %v818
        %v820 = vpop.f32.mrb[0].mxu0
        %821 = vmatprep.mubr.bf16.mxu0 0
        %822 = vmatmul.mubr.bf16.gmra.mrb[0].mxu0 %v607
        %v823 = vpop.f32.mrb[0].mxu0
        %v824 = vadd.f32 0.0, %v823
        %v825 = vpop.f32.mrb[0].mxu0
        %v826 = vpop.f32.mrb[0].mxu0
        %v827 = vadd.f32 0.0, %v826
        %v828 = vpop.f32.mrb[0].mxu0
        %829 = vmatprep.mubr.bf16.mxu0 0
        %830 = vmatmul.mubr.bf16.gmra.mrb[0].mxu0 %v608
        %v831 = vpop.f32.mrb[0].mxu0
        %v832 = vadd.f32 0.0, %v831
        %v833 = vpop.f32.mrb[0].mxu0
        %v834 = vpop.f32.mrb[0].mxu0
        %v835 = vadd.f32 0.0, %v834
        %v836 = vpop.f32.mrb[0].mxu0
        %837 = vmatprep.mubr.bf16.mxu0 0
        %838 = vmatmul.mubr.bf16.gmra.mrb[0].mxu0 %v609
        %v839 = vpop.f32.mrb[0].mxu0
        %v840 = vadd.f32 0.0, %v839
        %v841 = vpop.f32.mrb[0].mxu0
        %v842 = vpop.f32.mrb[0].mxu0
        %v843 = vadd.f32 0.0, %v842
        %v844 = vpop.f32.mrb[0].mxu0
        %845 = vmatprep.mubr.bf16.mxu0 0
        %846 = vmatmul.mubr.bf16.gmra.mrb[0].mxu0 %v610
        %v847 = vpop.f32.mrb[0].mxu0
        %v848 = vadd.f32 0.0, %v847
        %v849 = vpop.f32.mrb[0].mxu0
        %v850 = vpop.f32.mrb[0].mxu0
        %v851 = vadd.f32 0.0, %v850
        %v852 = vpop.f32.mrb[0].mxu0
        %853 = vmatprep.mubr.bf16.mxu0 0
        %854 = vmatmul.mubr.bf16.gmra.mrb[0].mxu0 %v611
        %v855 = vpop.f32.mrb[0].mxu0
        %v856 = vadd.f32 0.0, %v855
        %v857 = vpop.f32.mrb[0].mxu0
        %v858 = vpop.f32.mrb[0].mxu0
        %v859 = vadd.f32 0.0, %v858
        %v860 = vpop.f32.mrb[0].mxu0
        %861 = vmatprep.mubr.bf16.mxu0 0
        %862 = vmatmul.mubr.bf16.gmra.mrb[0].mxu0 %v612
        %v863 = vpop.f32.mrb[0].mxu0
        %v864 = vadd.f32 0.0, %v863
        %v865 = vpop.f32.mrb[0].mxu0
        %v866 = vpop.f32.mrb[0].mxu0
        %v867 = vadd.f32 0.0, %v866
        %v868 = vpop.f32.mrb[0].mxu0
        %869 = vmatprep.mubr.bf16.mxu0 0
        %870 = vmatmul.mubr.bf16.gmra.mrb[0].mxu0 %v613
        %v871 = vpop.f32.mrb[0].mxu0
        %v872 = vadd.f32 0.0, %v871
        %v873 = vpop.f32.mrb[0].mxu0
        %v874 = vpop.f32.mrb[0].mxu0
        %v875 = vadd.f32 0.0, %v874
        %v876 = vpop.f32.mrb[0].mxu0
        %877 = vmatprep.mubr.bf16.mxu0 0
        %878 = vmatmul.mubr.bf16.gmra.mrb[0].mxu0 %v614
        %v879 = vpop.f32.mrb[0].mxu0
        %v880 = vadd.f32 0.0, %v879
        %v881 = vpop.f32.mrb[0].mxu0
        %v882 = vpop.f32.mrb[0].mxu0
        %v883 = vadd.f32 0.0, %v882
        %v884 = vpop.f32.mrb[0].mxu0
        %885 = vmatprep.mubr.bf16.mxu0 0
        %886 = vmatmul.mubr.bf16.gmra.mrb[0].mxu0 %v615
        %v887 = vpop.f32.mrb[0].mxu0
        %v888 = vadd.f32 0.0, %v887
        %v889 = vpop.f32.mrb[0].mxu0
        %v890 = vpop.f32.mrb[0].mxu0
        %v891 = vadd.f32 0.0, %v890
        %v892 = vpop.f32.mrb[0].mxu0
        %893 = vmatprep.mubr.bf16.mxu0 0
        %894 = vmatmul.mubr.bf16.gmra.mrb[0].mxu0 %v616
        %v895 = vpop.f32.mrb[0].mxu0
        %v896 = vadd.f32 0.0, %v895
        %v897 = vpop.f32.mrb[0].mxu0
        %v898 = vpop.f32.mrb[0].mxu0
        %v899 = vadd.f32 0.0, %v898
        %v900 = vpop.f32.mrb[0].mxu0
        %901 = vmatprep.mubr.bf16.mxu0 0
        %902 = vmatmul.mubr.bf16.gmra.mrb[0].mxu0 %v617
        %v903 = vpop.f32.mrb[0].mxu0
        %v904 = vadd.f32 0.0, %v903
        %v905 = vpop.f32.mrb[0].mxu0
        %v906 = vpop.f32.mrb[0].mxu0
        %v907 = vadd.f32 0.0, %v906
        %v908 = vpop.f32.mrb[0].mxu0
        %909 = vmatprep.mubr.bf16.mxu0 0
        %910 = vmatmul.mubr.bf16.gmra.mrb[0].mxu0 %v618
        %v911 = vpop.f32.mrb[0].mxu0
        %v912 = vadd.f32 0.0, %v911
        %v913 = vpop.f32.mrb[0].mxu0
        %v914 = vpop.f32.mrb[0].mxu0
        %v915 = vadd.f32 0.0, %v914
        %v916 = vpop.f32.mrb[0].mxu0
        %917 = vmatprep.mubr.bf16.mxu0 0
        %918 = vmatmul.mubr.bf16.gmra.mrb[0].mxu0 %v619
        %v919 = vpop.f32.mrb[0].mxu0
        %v920 = vadd.f32 0.0, %v919
        %v921 = vpop.f32.mrb[0].mxu0
        %v922 = vpop.f32.mrb[0].mxu0
        %v923 = vadd.f32 0.0, %v922
        %v924 = vpop.f32.mrb[0].mxu0
        %925 = vmatprep.mubr.bf16.mxu0 0
        %926 = vmatmul.mubr.bf16.gmra.mrb[0].mxu0 %v620
        %v927 = vpop.f32.mrb[0].mxu0
        %v928 = vadd.f32 0.0, %v927
        %v929 = vpop.f32.mrb[0].mxu0
        %v930 = vpop.f32.mrb[0].mxu0
        %v931 = vadd.f32 0.0, %v930
        %v932 = vpop.f32.mrb[0].mxu0
        %933 = vmatprep.mubr.bf16.mxu0 0
        %934 = vmatmul.mubr.bf16.gmra.mrb[0].mxu0 %v621
        %v935 = vpop.f32.mrb[0].mxu0
        %v936 = vadd.f32 0.0, %v935
        %v937 = vpop.f32.mrb[0].mxu0
        %v938 = vpop.f32.mrb[0].mxu0
        %v939 = vadd.f32 0.0, %v938
        %v940 = vpop.f32.mrb[0].mxu0
        %941 = vmatprep.mubr.bf16.mxu0 0
        %942 = vmatmul.mubr.bf16.gmra.mrb[0].mxu0 %v622
        %v943 = vpop.f32.mrb[0].mxu0
        %v944 = vadd.f32 0.0, %v943
        %v945 = vpop.f32.mrb[0].mxu0
        %v946 = vpop.f32.mrb[0].mxu0
        %v947 = vadd.f32 0.0, %v946
        %v948 = vpop.f32.mrb[0].mxu0
        %949 = vmatprep.mubr.bf16.mxu0 0
        %950 = vmatmul.mubr.bf16.gmra.mrb[0].mxu0 %v623
        %v951 = vpop.f32.mrb[0].mxu0
        %v952 = vadd.f32 0.0, %v951
        %v953 = vpop.f32.mrb[0].mxu0
        %v954 = vpop.f32.mrb[0].mxu0
        %v955 = vadd.f32 0.0, %v954
        %v956 = vpop.f32.mrb[0].mxu0
        %957 = vmatprep.mubr.bf16.mxu0 0
        %958 = vmatmul.mubr.bf16.gmra.mrb[0].mxu0 %v624
        %v959 = vpop.f32.mrb[0].mxu0
        %v960 = vadd.f32 0.0, %v959
        %v961 = vpop.f32.mrb[0].mxu0
        %v962 = vpop.f32.mrb[0].mxu0
        %v963 = vadd.f32 0.0, %v962
        %v964 = vpop.f32.mrb[0].mxu0
        %965 = vmatprep.mubr.bf16.mxu0 0
        %966 = vmatmul.mubr.bf16.gmra.mrb[0].mxu0 %v625
        %v967 = vpop.f32.mrb[0].mxu0
        %v968 = vadd.f32 0.0, %v967
        %v969 = vpop.f32.mrb[0].mxu0
        %v970 = vpop.f32.mrb[0].mxu0
        %v971 = vadd.f32 0.0, %v970
        %v972 = vpop.f32.mrb[0].mxu0
        %973 = vmatprep.mubr.bf16.mxu0 0
        %974 = vmatmul.mubr.bf16.gmra.mrb[0].mxu0 %v626
        %v975 = vpop.f32.mrb[0].mxu0
        %v976 = vadd.f32 0.0, %v975
        %v977 = vpop.f32.mrb[0].mxu0
        %v978 = vpop.f32.mrb[0].mxu0
        %v979 = vadd.f32 0.0, %v978
        %v980 = vpop.f32.mrb[0].mxu0
        %981 = vmatprep.mubr.bf16.mxu0 0
        %982 = vmatmul.mubr.bf16.gmra.mrb[0].mxu0 %v627
        %v983 = vpop.f32.mrb[0].mxu0
        %v984 = vadd.f32 0.0, %v983
        %v985 = vpop.f32.mrb[0].mxu0
        %v986 = vpop.f32.mrb[0].mxu0
        %v987 = vadd.f32 0.0, %v986
        %v988 = vpop.f32.mrb[0].mxu0
        %989 = vmatprep.mubr.bf16.mxu0 0
        %990 = vmatmul.mubr.bf16.gmra.mrb[0].mxu0 %v628
        %v991 = vpop.f32.mrb[0].mxu0
        %v992 = vadd.f32 0.0, %v991
        %v993 = vpop.f32.mrb[0].mxu0
        %v994 = vpop.f32.mrb[0].mxu0
        %v995 = vadd.f32 0.0, %v994
        %v996 = vpop.f32.mrb[0].mxu0
        %997 = vdwg.mxu0
        %v998 = vadd.f32 %v325, %v744
        %v999 = vadd.f32 %v326, %v747
        %v1000 = vadd.f32 %v327, %v752
        %v1001 = vadd.f32 %v328, %v755
        %v1002 = vadd.f32 %v329, %v760
        %v1003 = vadd.f32 %v330, %v763
        %v1004 = vadd.f32 %v331, %v768
        %v1005 = vadd.f32 %v332, %v771
        %v1006 = vadd.f32 %v333, %v776
        %v1007 = vadd.f32 %v334, %v779
        %v1008 = vadd.f32 %v335, %v784
        %v1009 = vadd.f32 %v336, %v787
        %v1010 = vadd.f32 %v337, %v792
        %v1011 = vadd.f32 %v338, %v795
        %v1012 = vadd.f32 %v339, %v800
        %v1013 = vadd.f32 %v340, %v803
        %v1014 = vadd.f32 %v341, %v808
        %v1015 = vadd.f32 %v342, %v811
        %v1016 = vadd.f32 %v343, %v816
        %v1017 = vadd.f32 %v344, %v819
        %v1018 = vadd.f32 %v345, %v824
        %v1019 = vadd.f32 %v346, %v827
        %v1020 = vadd.f32 %v347, %v832
        %v1021 = vadd.f32 %v348, %v835
        %v1022 = vadd.f32 %v349, %v840
        %v1023 = vadd.f32 %v350, %v843
        %v1024 = vadd.f32 %v351, %v848
        %v1025 = vadd.f32 %v352, %v851
        %v1026 = vadd.f32 %v353, %v856
        %v1027 = vadd.f32 %v354, %v859
        %v1028 = vadd.f32 %v355, %v864
        %v1029 = vadd.f32 %v356, %v867
        %v1030 = vadd.f32 %v357, %v872
        %v1031 = vadd.f32 %v358, %v875
        %v1032 = vadd.f32 %v359, %v880
        %v1033 = vadd.f32 %v360, %v883
        %v1034 = vadd.f32 %v361, %v888
        %v1035 = vadd.f32 %v362, %v891
        %v1036 = vadd.f32 %v363, %v896
        %v1037 = vadd.f32 %v364, %v899
        %v1038 = vadd.f32 %v365, %v904
        %v1039 = vadd.f32 %v366, %v907
        %v1040 = vadd.f32 %v367, %v912
        %v1041 = vadd.f32 %v368, %v915
        %v1042 = vadd.f32 %v369, %v920
        %v1043 = vadd.f32 %v370, %v923
        %v1044 = vadd.f32 %v371, %v928
        %v1045 = vadd.f32 %v372, %v931
        %v1046 = vadd.f32 %v373, %v936
        %v1047 = vadd.f32 %v374, %v939
        %v1048 = vadd.f32 %v375, %v944
        %v1049 = vadd.f32 %v376, %v947
        %v1050 = vadd.f32 %v377, %v952
        %v1051 = vadd.f32 %v378, %v955
        %v1052 = vadd.f32 %v379, %v960
        %v1053 = vadd.f32 %v380, %v963
        %v1054 = vadd.f32 %v381, %v968
        %v1055 = vadd.f32 %v382, %v971
        %v1056 = vadd.f32 %v383, %v976
        %v1057 = vadd.f32 %v384, %v979
        %v1058 = vadd.f32 %v385, %v984
        %v1059 = vadd.f32 %v386, %v987
        %v1060 = vadd.f32 %v387, %v992
        %v1061 = vadd.f32 %v388, %v995
        %1062 = vst [vmem:[#allocation2] sm:$0xff] %v998
        %1063 = vst [vmem:[#allocation2 + $0x8] sm:$0xff] %v999
        %1064 = vst [vmem:[#allocation2 + $0x10] sm:$0xff] %v1000
        %1065 = vst [vmem:[#allocation2 + $0x18] sm:$0xff] %v1001
        %1066 = vst [vmem:[#allocation2 + $0x20] sm:$0xff] %v1002
        %1067 = vst [vmem:[#allocation2 + $0x28] sm:$0xff] %v1003
        %1068 = vst [vmem:[#allocation2 + $0x30] sm:$0xff] %v1004
        %1069 = vst [vmem:[#allocation2 + $0x38] sm:$0xff] %v1005
        %1070 = vst [vmem:[#allocation2 + $0x40] sm:$0xff] %v1006
        %1071 = vst [vmem:[#allocation2 + $0x48] sm:$0xff] %v1007
        %1072 = vst [vmem:[#allocation2 + $0x50] sm:$0xff] %v1008
        %1073 = vst [vmem:[#allocation2 + $0x58] sm:$0xff] %v1009
        %1074 = vst [vmem:[#allocation2 + $0x60] sm:$0xff] %v1010
        %1075 = vst [vmem:[#allocation2 + $0x68] sm:$0xff] %v1011
        %1076 = vst [vmem:[#allocation2 + $0x70] sm:$0xff] %v1012
        %1077 = vst [vmem:[#allocation2 + $0x78] sm:$0xff] %v1013
        %1078 = vst [vmem:[#allocation2 + $0x80] sm:$0xff] %v1014
        %1079 = vst [vmem:[#allocation2 + $0x88] sm:$0xff] %v1015
        %1080 = vst [vmem:[#allocation2 + $0x90] sm:$0xff] %v1016
        %1081 = vst [vmem:[#allocation2 + $0x98] sm:$0xff] %v1017
        %1082 = vst [vmem:[#allocation2 + $0xa0] sm:$0xff] %v1018
        %1083 = vst [vmem:[#allocation2 + $0xa8] sm:$0xff] %v1019
        %1084 = vst [vmem:[#allocation2 + $0xb0] sm:$0xff] %v1020
        %1085 = vst [vmem:[#allocation2 + $0xb8] sm:$0xff] %v1021
        %1086 = vst [vmem:[#allocation2 + $0xc0] sm:$0xff] %v1022
        %1087 = vst [vmem:[#allocation2 + $0xc8] sm:$0xff] %v1023
        %1088 = vst [vmem:[#allocation2 + $0xd0] sm:$0xff] %v1024
        %1089 = vst [vmem:[#allocation2 + $0xd8] sm:$0xff] %v1025
        %1090 = vst [vmem:[#allocation2 + $0xe0] sm:$0xff] %v1026
        %1091 = vst [vmem:[#allocation2 + $0xe8] sm:$0xff] %v1027
        %1092 = vst [vmem:[#allocation2 + $0xf0] sm:$0xff] %v1028
        %1093 = vst [vmem:[#allocation2 + $0xf8] sm:$0xff] %v1029
        %1094 = vst [vmem:[#allocation2 + $0x100] sm:$0xff] %v1030
        %1095 = vst [vmem:[#allocation2 + $0x108] sm:$0xff] %v1031
        %1096 = vst [vmem:[#allocation2 + $0x110] sm:$0xff] %v1032
        %1097 = vst [vmem:[#allocation2 + $0x118] sm:$0xff] %v1033
        %1098 = vst [vmem:[#allocation2 + $0x120] sm:$0xff] %v1034
        %1099 = vst [vmem:[#allocation2 + $0x128] sm:$0xff] %v1035
        %1100 = vst [vmem:[#allocation2 + $0x130] sm:$0xff] %v1036
        %1101 = vst [vmem:[#allocation2 + $0x138] sm:$0xff] %v1037
        %1102 = vst [vmem:[#allocation2 + $0x140] sm:$0xff] %v1038
        %1103 = vst [vmem:[#allocation2 + $0x148] sm:$0xff] %v1039
        %1104 = vst [vmem:[#allocation2 + $0x150] sm:$0xff] %v1040
        %1105 = vst [vmem:[#allocation2 + $0x158] sm:$0xff] %v1041
        %1106 = vst [vmem:[#allocation2 + $0x160] sm:$0xff] %v1042
        %1107 = vst [vmem:[#allocation2 + $0x168] sm:$0xff] %v1043
        %1108 = vst [vmem:[#allocation2 + $0x170] sm:$0xff] %v1044
        %1109 = vst [vmem:[#allocation2 + $0x178] sm:$0xff] %v1045
        %1110 = vst [vmem:[#allocation2 + $0x180] sm:$0xff] %v1046
        %1111 = vst [vmem:[#allocation2 + $0x188] sm:$0xff] %v1047
        %1112 = vst [vmem:[#allocation2 + $0x190] sm:$0xff] %v1048
        %1113 = vst [vmem:[#allocation2 + $0x198] sm:$0xff] %v1049
        %1114 = vst [vmem:[#allocation2 + $0x1a0] sm:$0xff] %v1050
        %1115 = vst [vmem:[#allocation2 + $0x1a8] sm:$0xff] %v1051
        %1116 = vst [vmem:[#allocation2 + $0x1b0] sm:$0xff] %v1052
        %1117 = vst [vmem:[#allocation2 + $0x1b8] sm:$0xff] %v1053
        %1118 = vst [vmem:[#allocation2 + $0x1c0] sm:$0xff] %v1054
        %1119 = vst [vmem:[#allocation2 + $0x1c8] sm:$0xff] %v1055
        %1120 = vst [vmem:[#allocation2 + $0x1d0] sm:$0xff] %v1056
        %1121 = vst [vmem:[#allocation2 + $0x1d8] sm:$0xff] %v1057
        %1122 = vst [vmem:[#allocation2 + $0x1e0] sm:$0xff] %v1058
        %1123 = vst [vmem:[#allocation2 + $0x1e8] sm:$0xff] %v1059
        %1124 = vst [vmem:[#allocation2 + $0x1f0] sm:$0xff] %v1060
        %1125 = vst [vmem:[#allocation2 + $0x1f8] sm:$0xff] %v1061
        // Predicated region
        $region45: #{tpu_custom_call.1} parent=31 // pred_check
          %p1126 = pneg %p257
        $region46: #{tpu_custom_call.1} parent=31 // pred_check_branch
          %1128 = sbr.rel (%p1126) target = $region48
        $region47: #{tpu_custom_call.1} parent=31 // pred_region
          %v1129 = vld [vmem:[#allocation2] sm:$0xff]
          %v1130 = vld [vmem:[#allocation2 + $0x8] sm:$0xff]
          %v1131 = vld [vmem:[#allocation2 + $0x10] sm:$0xff]
          %v1132 = vld [vmem:[#allocation2 + $0x18] sm:$0xff]
          %v1133 = vld [vmem:[#allocation2 + $0x20] sm:$0xff]
          %v1134 = vld [vmem:[#allocation2 + $0x28] sm:$0xff]
          %v1135 = vld [vmem:[#allocation2 + $0x30] sm:$0xff]
          %v1136 = vld [vmem:[#allocation2 + $0x38] sm:$0xff]
          %v1137 = vld [vmem:[#allocation2 + $0x40] sm:$0xff]
          %v1138 = vld [vmem:[#allocation2 + $0x48] sm:$0xff]
          %v1139 = vld [vmem:[#allocation2 + $0x50] sm:$0xff]
          %v1140 = vld [vmem:[#allocation2 + $0x58] sm:$0xff]
          %v1141 = vld [vmem:[#allocation2 + $0x60] sm:$0xff]
          %v1142 = vld [vmem:[#allocation2 + $0x68] sm:$0xff]
          %v1143 = vld [vmem:[#allocation2 + $0x70] sm:$0xff]
          %v1144 = vld [vmem:[#allocation2 + $0x78] sm:$0xff]
          %v1145 = vld [vmem:[#allocation2 + $0x80] sm:$0xff]
          %v1146 = vld [vmem:[#allocation2 + $0x88] sm:$0xff]
          %v1147 = vld [vmem:[#allocation2 + $0x90] sm:$0xff]
          %v1148 = vld [vmem:[#allocation2 + $0x98] sm:$0xff]
          %v1149 = vld [vmem:[#allocation2 + $0xa0] sm:$0xff]
          %v1150 = vld [vmem:[#allocation2 + $0xa8] sm:$0xff]
          %v1151 = vld [vmem:[#allocation2 + $0xb0] sm:$0xff]
          %v1152 = vld [vmem:[#allocation2 + $0xb8] sm:$0xff]
          %v1153 = vld [vmem:[#allocation2 + $0xc0] sm:$0xff]
          %v1154 = vld [vmem:[#allocation2 + $0xc8] sm:$0xff]
          %v1155 = vld [vmem:[#allocation2 + $0xd0] sm:$0xff]
          %v1156 = vld [vmem:[#allocation2 + $0xd8] sm:$0xff]
          %v1157 = vld [vmem:[#allocation2 + $0xe0] sm:$0xff]
          %v1158 = vld [vmem:[#allocation2 + $0xe8] sm:$0xff]
          %v1159 = vld [vmem:[#allocation2 + $0xf0] sm:$0xff]
          %v1160 = vld [vmem:[#allocation2 + $0xf8] sm:$0xff]
          %v1161 = vld [vmem:[#allocation2 + $0x100] sm:$0xff]
          %v1162 = vld [vmem:[#allocation2 + $0x108] sm:$0xff]
          %v1163 = vld [vmem:[#allocation2 + $0x110] sm:$0xff]
          %v1164 = vld [vmem:[#allocation2 + $0x118] sm:$0xff]
          %v1165 = vld [vmem:[#allocation2 + $0x120] sm:$0xff]
          %v1166 = vld [vmem:[#allocation2 + $0x128] sm:$0xff]
          %v1167 = vld [vmem:[#allocation2 + $0x130] sm:$0xff]
          %v1168 = vld [vmem:[#allocation2 + $0x138] sm:$0xff]
          %v1169 = vld [vmem:[#allocation2 + $0x140] sm:$0xff]
          %v1170 = vld [vmem:[#allocation2 + $0x148] sm:$0xff]
          %v1171 = vld [vmem:[#allocation2 + $0x150] sm:$0xff]
          %v1172 = vld [vmem:[#allocation2 + $0x158] sm:$0xff]
          %v1173 = vld [vmem:[#allocation2 + $0x160] sm:$0xff]
          %v1174 = vld [vmem:[#allocation2 + $0x168] sm:$0xff]
          %v1175 = vld [vmem:[#allocation2 + $0x170] sm:$0xff]
          %v1176 = vld [vmem:[#allocation2 + $0x178] sm:$0xff]
          %v1177 = vld [vmem:[#allocation2 + $0x180] sm:$0xff]
          %v1178 = vld [vmem:[#allocation2 + $0x188] sm:$0xff]
          %v1179 = vld [vmem:[#allocation2 + $0x190] sm:$0xff]
          %v1180 = vld [vmem:[#allocation2 + $0x198] sm:$0xff]
          %v1181 = vld [vmem:[#allocation2 + $0x1a0] sm:$0xff]
          %v1182 = vld [vmem:[#allocation2 + $0x1a8] sm:$0xff]
          %v1183 = vld [vmem:[#allocation2 + $0x1b0] sm:$0xff]
          %v1184 = vld [vmem:[#allocation2 + $0x1b8] sm:$0xff]
          %v1185 = vld [vmem:[#allocation2 + $0x1c0] sm:$0xff]
          %v1186 = vld [vmem:[#allocation2 + $0x1c8] sm:$0xff]
          %v1187 = vld [vmem:[#allocation2 + $0x1d0] sm:$0xff]
          %v1188 = vld [vmem:[#allocation2 + $0x1d8] sm:$0xff]
          %v1189 = vld [vmem:[#allocation2 + $0x1e0] sm:$0xff]
          %v1190 = vld [vmem:[#allocation2 + $0x1e8] sm:$0xff]
          %v1191 = vld [vmem:[#allocation2 + $0x1f0] sm:$0xff]
          %v1192 = vld [vmem:[#allocation2 + $0x1f8] sm:$0xff]
          %v1193 = vld [vmem:[%s254] sm:$0x1]
          %v1195 = vlaneseq
          %v1196 = vshrl.u32 %v1195, 7
          %v1197 = vsub.s32 0, %v1196
          %v1198 = vrot.slane %v1193, %v1197
          %v1200 = vadd.f32 %v1129, %v1198
          %v1201 = vadd.f32 %v1130, %v1198
          %v1202 = vadd.f32 %v1131, %v1198
          %v1203 = vadd.f32 %v1132, %v1198
          %v1204 = vadd.f32 %v1133, %v1198
          %v1205 = vadd.f32 %v1134, %v1198
          %v1206 = vadd.f32 %v1135, %v1198
          %v1207 = vadd.f32 %v1136, %v1198
          %v1208 = vadd.f32 %v1137, %v1198
          %v1209 = vadd.f32 %v1138, %v1198
          %v1210 = vadd.f32 %v1139, %v1198
          %v1211 = vadd.f32 %v1140, %v1198
          %v1212 = vadd.f32 %v1141, %v1198
          %v1213 = vadd.f32 %v1142, %v1198
          %v1214 = vadd.f32 %v1143, %v1198
          %v1215 = vadd.f32 %v1144, %v1198
          %v1216 = vadd.f32 %v1145, %v1198
          %v1217 = vadd.f32 %v1146, %v1198
          %v1218 = vadd.f32 %v1147, %v1198
          %v1219 = vadd.f32 %v1148, %v1198
          %v1220 = vadd.f32 %v1149, %v1198
          %v1221 = vadd.f32 %v1150, %v1198
          %v1222 = vadd.f32 %v1151, %v1198
          %v1223 = vadd.f32 %v1152, %v1198
          %v1224 = vadd.f32 %v1153, %v1198
          %v1225 = vadd.f32 %v1154, %v1198
          %v1226 = vadd.f32 %v1155, %v1198
          %v1227 = vadd.f32 %v1156, %v1198
          %v1228 = vadd.f32 %v1157, %v1198
          %v1229 = vadd.f32 %v1158, %v1198
          %v1230 = vadd.f32 %v1159, %v1198
          %v1231 = vadd.f32 %v1160, %v1198
          %v1232 = vadd.f32 %v1161, %v1198
          %v1233 = vadd.f32 %v1162, %v1198
          %v1234 = vadd.f32 %v1163, %v1198
          %v1235 = vadd.f32 %v1164, %v1198
          %v1236 = vadd.f32 %v1165, %v1198
          %v1237 = vadd.f32 %v1166, %v1198
          %v1238 = vadd.f32 %v1167, %v1198
          %v1239 = vadd.f32 %v1168, %v1198
          %v1240 = vadd.f32 %v1169, %v1198
          %v1241 = vadd.f32 %v1170, %v1198
          %v1242 = vadd.f32 %v1171, %v1198
          %v1243 = vadd.f32 %v1172, %v1198
          %v1244 = vadd.f32 %v1173, %v1198
          %v1245 = vadd.f32 %v1174, %v1198
          %v1246 = vadd.f32 %v1175, %v1198
          %v1247 = vadd.f32 %v1176, %v1198
          %v1248 = vadd.f32 %v1177, %v1198
          %v1249 = vadd.f32 %v1178, %v1198
          %v1250 = vadd.f32 %v1179, %v1198
          %v1251 = vadd.f32 %v1180, %v1198
          %v1252 = vadd.f32 %v1181, %v1198
          %v1253 = vadd.f32 %v1182, %v1198
          %v1254 = vadd.f32 %v1183, %v1198
          %v1255 = vadd.f32 %v1184, %v1198
          %v1256 = vadd.f32 %v1185, %v1198
          %v1257 = vadd.f32 %v1186, %v1198
          %v1258 = vadd.f32 %v1187, %v1198
          %v1259 = vadd.f32 %v1188, %v1198
          %v1260 = vadd.f32 %v1189, %v1198
          %v1261 = vadd.f32 %v1190, %v1198
          %v1262 = vadd.f32 %v1191, %v1198
          %v1263 = vadd.f32 %v1192, %v1198
          %vm1264 = vcmp.ge.f32.partialorder %v1200, 0.0
          %vm1265 = vcmp.ge.f32.partialorder %v1201, 0.0
          %vm1266 = vcmp.ge.f32.partialorder %v1202, 0.0
          %vm1267 = vcmp.ge.f32.partialorder %v1203, 0.0
          %vm1268 = vcmp.ge.f32.partialorder %v1204, 0.0
          %vm1269 = vcmp.ge.f32.partialorder %v1205, 0.0
          %vm1270 = vcmp.ge.f32.partialorder %v1206, 0.0
          %vm1271 = vcmp.ge.f32.partialorder %v1207, 0.0
          %vm1272 = vcmp.ge.f32.partialorder %v1208, 0.0
          %vm1273 = vcmp.ge.f32.partialorder %v1209, 0.0
          %vm1274 = vcmp.ge.f32.partialorder %v1210, 0.0
          %vm1275 = vcmp.ge.f32.partialorder %v1211, 0.0
          %vm1276 = vcmp.ge.f32.partialorder %v1212, 0.0
          %vm1277 = vcmp.ge.f32.partialorder %v1213, 0.0
          %vm1278 = vcmp.ge.f32.partialorder %v1214, 0.0
          %vm1279 = vcmp.ge.f32.partialorder %v1215, 0.0
          %vm1280 = vcmp.ge.f32.partialorder %v1216, 0.0
          %vm1281 = vcmp.ge.f32.partialorder %v1217, 0.0
          %vm1282 = vcmp.ge.f32.partialorder %v1218, 0.0
          %vm1283 = vcmp.ge.f32.partialorder %v1219, 0.0
          %vm1284 = vcmp.ge.f32.partialorder %v1220, 0.0
          %vm1285 = vcmp.ge.f32.partialorder %v1221, 0.0
          %vm1286 = vcmp.ge.f32.partialorder %v1222, 0.0
          %vm1287 = vcmp.ge.f32.partialorder %v1223, 0.0
          %vm1288 = vcmp.ge.f32.partialorder %v1224, 0.0
          %vm1289 = vcmp.ge.f32.partialorder %v1225, 0.0
          %vm1290 = vcmp.ge.f32.partialorder %v1226, 0.0
          %vm1291 = vcmp.ge.f32.partialorder %v1227, 0.0
          %vm1292 = vcmp.ge.f32.partialorder %v1228, 0.0
          %vm1293 = vcmp.ge.f32.partialorder %v1229, 0.0
          %vm1294 = vcmp.ge.f32.partialorder %v1230, 0.0
          %vm1295 = vcmp.ge.f32.partialorder %v1231, 0.0
          %vm1296 = vcmp.ge.f32.partialorder %v1232, 0.0
          %vm1297 = vcmp.ge.f32.partialorder %v1233, 0.0
          %vm1298 = vcmp.ge.f32.partialorder %v1234, 0.0
          %vm1299 = vcmp.ge.f32.partialorder %v1235, 0.0
          %vm1300 = vcmp.ge.f32.partialorder %v1236, 0.0
          %vm1301 = vcmp.ge.f32.partialorder %v1237, 0.0
          %vm1302 = vcmp.ge.f32.partialorder %v1238, 0.0
          %vm1303 = vcmp.ge.f32.partialorder %v1239, 0.0
          %vm1304 = vcmp.ge.f32.partialorder %v1240, 0.0
          %vm1305 = vcmp.ge.f32.partialorder %v1241, 0.0
          %vm1306 = vcmp.ge.f32.partialorder %v1242, 0.0
          %vm1307 = vcmp.ge.f32.partialorder %v1243, 0.0
          %vm1308 = vcmp.ge.f32.partialorder %v1244, 0.0
          %vm1309 = vcmp.ge.f32.partialorder %v1245, 0.0
          %vm1310 = vcmp.ge.f32.partialorder %v1246, 0.0
          %vm1311 = vcmp.ge.f32.partialorder %v1247, 0.0
          %vm1312 = vcmp.ge.f32.partialorder %v1248, 0.0
          %vm1313 = vcmp.ge.f32.partialorder %v1249, 0.0
          %vm1314 = vcmp.ge.f32.partialorder %v1250, 0.0
          %vm1315 = vcmp.ge.f32.partialorder %v1251, 0.0
          %vm1316 = vcmp.ge.f32.partialorder %v1252, 0.0
          %vm1317 = vcmp.ge.f32.partialorder %v1253, 0.0
          %vm1318 = vcmp.ge.f32.partialorder %v1254, 0.0
          %vm1319 = vcmp.ge.f32.partialorder %v1255, 0.0
          %vm1320 = vcmp.ge.f32.partialorder %v1256, 0.0
          %vm1321 = vcmp.ge.f32.partialorder %v1257, 0.0
          %vm1322 = vcmp.ge.f32.partialorder %v1258, 0.0
          %vm1323 = vcmp.ge.f32.partialorder %v1259, 0.0
          %vm1324 = vcmp.ge.f32.partialorder %v1260, 0.0
          %vm1325 = vcmp.ge.f32.partialorder %v1261, 0.0
          %vm1326 = vcmp.ge.f32.partialorder %v1262, 0.0
          %vm1327 = vcmp.ge.f32.partialorder %v1263, 0.0
          %v1328 = vmul.f32 %v1200, 0.1
          %v1329 = vmul.f32 %v1201, 0.1
          %v1330 = vmul.f32 %v1202, 0.1
          %v1331 = vmul.f32 %v1203, 0.1
          %v1332 = vmul.f32 %v1204, 0.1
          %v1333 = vmul.f32 %v1205, 0.1
          %v1334 = vmul.f32 %v1206, 0.1
          %v1335 = vmul.f32 %v1207, 0.1
          %v1336 = vmul.f32 %v1208, 0.1
          %v1337 = vmul.f32 %v1209, 0.1
          %v1338 = vmul.f32 %v1210, 0.1
          %v1339 = vmul.f32 %v1211, 0.1
          %v1340 = vmul.f32 %v1212, 0.1
          %v1341 = vmul.f32 %v1213, 0.1
          %v1342 = vmul.f32 %v1214, 0.1
          %v1343 = vmul.f32 %v1215, 0.1
          %v1344 = vmul.f32 %v1216, 0.1
          %v1345 = vmul.f32 %v1217, 0.1
          %v1346 = vmul.f32 %v1218, 0.1
          %v1347 = vmul.f32 %v1219, 0.1
          %v1348 = vmul.f32 %v1220, 0.1
          %v1349 = vmul.f32 %v1221, 0.1
          %v1350 = vmul.f32 %v1222, 0.1
          %v1351 = vmul.f32 %v1223, 0.1
          %v1352 = vmul.f32 %v1224, 0.1
          %v1353 = vmul.f32 %v1225, 0.1
          %v1354 = vmul.f32 %v1226, 0.1
          %v1355 = vmul.f32 %v1227, 0.1
          %v1356 = vmul.f32 %v1228, 0.1
          %v1357 = vmul.f32 %v1229, 0.1
          %v1358 = vmul.f32 %v1230, 0.1
          %v1359 = vmul.f32 %v1231, 0.1
          %v1360 = vmul.f32 %v1232, 0.1
          %v1361 = vmul.f32 %v1233, 0.1
          %v1362 = vmul.f32 %v1234, 0.1
          %v1363 = vmul.f32 %v1235, 0.1
          %v1364 = vmul.f32 %v1236, 0.1
          %v1365 = vmul.f32 %v1237, 0.1
          %v1366 = vmul.f32 %v1238, 0.1
          %v1367 = vmul.f32 %v1239, 0.1
          %v1368 = vmul.f32 %v1240, 0.1
          %v1369 = vmul.f32 %v1241, 0.1
          %v1370 = vmul.f32 %v1242, 0.1
          %v1371 = vmul.f32 %v1243, 0.1
          %v1372 = vmul.f32 %v1244, 0.1
          %v1373 = vmul.f32 %v1245, 0.1
          %v1374 = vmul.f32 %v1246, 0.1
          %v1375 = vmul.f32 %v1247, 0.1
          %v1376 = vmul.f32 %v1248, 0.1
          %v1377 = vmul.f32 %v1249, 0.1
          %v1378 = vmul.f32 %v1250, 0.1
          %v1379 = vmul.f32 %v1251, 0.1
          %v1380 = vmul.f32 %v1252, 0.1
          %v1381 = vmul.f32 %v1253, 0.1
          %v1382 = vmul.f32 %v1254, 0.1
          %v1383 = vmul.f32 %v1255, 0.1
          %v1384 = vmul.f32 %v1256, 0.1
          %v1385 = vmul.f32 %v1257, 0.1
          %v1386 = vmul.f32 %v1258, 0.1
          %v1387 = vmul.f32 %v1259, 0.1
          %v1388 = vmul.f32 %v1260, 0.1
          %v1389 = vmul.f32 %v1261, 0.1
          %v1390 = vmul.f32 %v1262, 0.1
          %v1391 = vmul.f32 %v1263, 0.1
          %v1392 = vsel %vm1264, %v1200, %v1328
          %v1393 = vsel %vm1265, %v1201, %v1329
          %v1394 = vsel %vm1266, %v1202, %v1330
          %v1395 = vsel %vm1267, %v1203, %v1331
          %v1396 = vsel %vm1268, %v1204, %v1332
          %v1397 = vsel %vm1269, %v1205, %v1333
          %v1398 = vsel %vm1270, %v1206, %v1334
          %v1399 = vsel %vm1271, %v1207, %v1335
          %v1400 = vsel %vm1272, %v1208, %v1336
          %v1401 = vsel %vm1273, %v1209, %v1337
          %v1402 = vsel %vm1274, %v1210, %v1338
          %v1403 = vsel %vm1275, %v1211, %v1339
          %v1404 = vsel %vm1276, %v1212, %v1340
          %v1405 = vsel %vm1277, %v1213, %v1341
          %v1406 = vsel %vm1278, %v1214, %v1342
          %v1407 = vsel %vm1279, %v1215, %v1343
          %v1408 = vsel %vm1280, %v1216, %v1344
          %v1409 = vsel %vm1281, %v1217, %v1345
          %v1410 = vsel %vm1282, %v1218, %v1346
          %v1411 = vsel %vm1283, %v1219, %v1347
          %v1412 = vsel %vm1284, %v1220, %v1348
          %v1413 = vsel %vm1285, %v1221, %v1349
          %v1414 = vsel %vm1286, %v1222, %v1350
          %v1415 = vsel %vm1287, %v1223, %v1351
          %v1416 = vsel %vm1288, %v1224, %v1352
          %v1417 = vsel %vm1289, %v1225, %v1353
          %v1418 = vsel %vm1290, %v1226, %v1354
          %v1419 = vsel %vm1291, %v1227, %v1355
          %v1420 = vsel %vm1292, %v1228, %v1356
          %v1421 = vsel %vm1293, %v1229, %v1357
          %v1422 = vsel %vm1294, %v1230, %v1358
          %v1423 = vsel %vm1295, %v1231, %v1359
          %v1424 = vsel %vm1296, %v1232, %v1360
          %v1425 = vsel %vm1297, %v1233, %v1361
          %v1426 = vsel %vm1298, %v1234, %v1362
          %v1427 = vsel %vm1299, %v1235, %v1363
          %v1428 = vsel %vm1300, %v1236, %v1364
          %v1429 = vsel %vm1301, %v1237, %v1365
          %v1430 = vsel %vm1302, %v1238, %v1366
          %v1431 = vsel %vm1303, %v1239, %v1367
          %v1432 = vsel %vm1304, %v1240, %v1368
          %v1433 = vsel %vm1305, %v1241, %v1369
          %v1434 = vsel %vm1306, %v1242, %v1370
          %v1435 = vsel %vm1307, %v1243, %v1371
          %v1436 = vsel %vm1308, %v1244, %v1372
          %v1437 = vsel %vm1309, %v1245, %v1373
          %v1438 = vsel %vm1310, %v1246, %v1374
          %v1439 = vsel %vm1311, %v1247, %v1375
          %v1440 = vsel %vm1312, %v1248, %v1376
          %v1441 = vsel %vm1313, %v1249, %v1377
          %v1442 = vsel %vm1314, %v1250, %v1378
          %v1443 = vsel %vm1315, %v1251, %v1379
          %v1444 = vsel %vm1316, %v1252, %v1380
          %v1445 = vsel %vm1317, %v1253, %v1381
          %v1446 = vsel %vm1318, %v1254, %v1382
          %v1447 = vsel %vm1319, %v1255, %v1383
          %v1448 = vsel %vm1320, %v1256, %v1384
          %v1449 = vsel %vm1321, %v1257, %v1385
          %v1450 = vsel %vm1322, %v1258, %v1386
          %v1451 = vsel %vm1323, %v1259, %v1387
          %v1452 = vsel %vm1324, %v1260, %v1388
          %v1453 = vsel %vm1325, %v1261, %v1389
          %v1454 = vsel %vm1326, %v1262, %v1390
          %v1455 = vsel %vm1327, %v1263, %v1391
          %v1456 = vpack.c.bf16 %v1393, %v1392
          %v1457 = vpack.c.bf16 %v1395, %v1394
          %v1458 = vpack.c.bf16 %v1397, %v1396
          %v1459 = vpack.c.bf16 %v1399, %v1398
          %v1460 = vpack.c.bf16 %v1401, %v1400
          %v1461 = vpack.c.bf16 %v1403, %v1402
          %v1462 = vpack.c.bf16 %v1405, %v1404
          %v1463 = vpack.c.bf16 %v1407, %v1406
          %v1464 = vpack.c.bf16 %v1409, %v1408
          %v1465 = vpack.c.bf16 %v1411, %v1410
          %v1466 = vpack.c.bf16 %v1413, %v1412
          %v1467 = vpack.c.bf16 %v1415, %v1414
          %v1468 = vpack.c.bf16 %v1417, %v1416
          %v1469 = vpack.c.bf16 %v1419, %v1418
          %v1470 = vpack.c.bf16 %v1421, %v1420
          %v1471 = vpack.c.bf16 %v1423, %v1422
          %v1472 = vpack.c.bf16 %v1425, %v1424
          %v1473 = vpack.c.bf16 %v1427, %v1426
          %v1474 = vpack.c.bf16 %v1429, %v1428
          %v1475 = vpack.c.bf16 %v1431, %v1430
          %v1476 = vpack.c.bf16 %v1433, %v1432
          %v1477 = vpack.c.bf16 %v1435, %v1434
          %v1478 = vpack.c.bf16 %v1437, %v1436
          %v1479 = vpack.c.bf16 %v1439, %v1438
          %v1480 = vpack.c.bf16 %v1441, %v1440
          %v1481 = vpack.c.bf16 %v1443, %v1442
          %v1482 = vpack.c.bf16 %v1445, %v1444
          %v1483 = vpack.c.bf16 %v1447, %v1446
          %v1484 = vpack.c.bf16 %v1449, %v1448
          %v1485 = vpack.c.bf16 %v1451, %v1450
          %v1486 = vpack.c.bf16 %v1453, %v1452
          %v1487 = vpack.c.bf16 %v1455, %v1454
          %v1520 = vunpack.c.l.b16 %v1456
          %v1521 = vunpack.c.h.b16 %v1456
          %v1522 = vunpack.c.l.b16 %v1457
          %v1523 = vunpack.c.h.b16 %v1457
          %v1524 = vunpack.c.l.b16 %v1458
          %v1525 = vunpack.c.h.b16 %v1458
          %v1526 = vunpack.c.l.b16 %v1459
          %v1527 = vunpack.c.h.b16 %v1459
          %v1528 = vunpack.c.l.b16 %v1460
          %v1529 = vunpack.c.h.b16 %v1460
          %v1530 = vunpack.c.l.b16 %v1461
          %v1531 = vunpack.c.h.b16 %v1461
          %v1532 = vunpack.c.l.b16 %v1462
          %v1533 = vunpack.c.h.b16 %v1462
          %v1534 = vunpack.c.l.b16 %v1463
          %v1535 = vunpack.c.h.b16 %v1463
          %v1536 = vunpack.c.l.b16 %v1464
          %v1537 = vunpack.c.h.b16 %v1464
          %v1538 = vunpack.c.l.b16 %v1465
          %v1539 = vunpack.c.h.b16 %v1465
          %v1540 = vunpack.c.l.b16 %v1466
          %v1541 = vunpack.c.h.b16 %v1466
          %v1542 = vunpack.c.l.b16 %v1467
          %v1543 = vunpack.c.h.b16 %v1467
          %v1544 = vunpack.c.l.b16 %v1468
          %v1545 = vunpack.c.h.b16 %v1468
          %v1546 = vunpack.c.l.b16 %v1469
          %v1547 = vunpack.c.h.b16 %v1469
          %v1548 = vunpack.c.l.b16 %v1470
          %v1549 = vunpack.c.h.b16 %v1470
          %v1550 = vunpack.c.l.b16 %v1471
          %v1551 = vunpack.c.h.b16 %v1471
          %v1552 = vunpack.c.l.b16 %v1472
          %v1553 = vunpack.c.h.b16 %v1472
          %v1554 = vunpack.c.l.b16 %v1473
          %v1555 = vunpack.c.h.b16 %v1473
          %v1556 = vunpack.c.l.b16 %v1474
          %v1557 = vunpack.c.h.b16 %v1474
          %v1558 = vunpack.c.l.b16 %v1475
          %v1559 = vunpack.c.h.b16 %v1475
          %v1560 = vunpack.c.l.b16 %v1476
          %v1561 = vunpack.c.h.b16 %v1476
          %v1562 = vunpack.c.l.b16 %v1477
          %v1563 = vunpack.c.h.b16 %v1477
          %v1564 = vunpack.c.l.b16 %v1478
          %v1565 = vunpack.c.h.b16 %v1478
          %v1566 = vunpack.c.l.b16 %v1479
          %v1567 = vunpack.c.h.b16 %v1479
          %v1568 = vunpack.c.l.b16 %v1480
          %v1569 = vunpack.c.h.b16 %v1480
          %v1570 = vunpack.c.l.b16 %v1481
          %v1571 = vunpack.c.h.b16 %v1481
          %v1572 = vunpack.c.l.b16 %v1482
          %v1573 = vunpack.c.h.b16 %v1482
          %v1574 = vunpack.c.l.b16 %v1483
          %v1575 = vunpack.c.h.b16 %v1483
          %v1576 = vunpack.c.l.b16 %v1484
          %v1577 = vunpack.c.h.b16 %v1484
          %v1578 = vunpack.c.l.b16 %v1485
          %v1579 = vunpack.c.h.b16 %v1485
          %v1580 = vunpack.c.l.b16 %v1486
          %v1581 = vunpack.c.h.b16 %v1486
          %v1582 = vunpack.c.l.b16 %v1487
          %v1583 = vunpack.c.h.b16 %v1487
          %v1584 = vpack.c.b16 %v1520, %v1520
          %v1585 = vpack.c.b16 %v1521, %v1521
          %v1586 = vpack.c.b16 %v1522, %v1522
          %v1587 = vpack.c.b16 %v1523, %v1523
          %v1588 = vpack.c.b16 %v1524, %v1524
          %v1589 = vpack.c.b16 %v1525, %v1525
          %v1590 = vpack.c.b16 %v1526, %v1526
          %v1591 = vpack.c.b16 %v1527, %v1527
          %v1592 = vpack.c.b16 %v1528, %v1528
          %v1593 = vpack.c.b16 %v1529, %v1529
          %v1594 = vpack.c.b16 %v1530, %v1530
          %v1595 = vpack.c.b16 %v1531, %v1531
          %v1596 = vpack.c.b16 %v1532, %v1532
          %v1597 = vpack.c.b16 %v1533, %v1533
          %v1598 = vpack.c.b16 %v1534, %v1534
          %v1599 = vpack.c.b16 %v1535, %v1535
          %v1600 = vpack.c.b16 %v1536, %v1536
          %v1601 = vpack.c.b16 %v1537, %v1537
          %v1602 = vpack.c.b16 %v1538, %v1538
          %v1603 = vpack.c.b16 %v1539, %v1539
          %v1604 = vpack.c.b16 %v1540, %v1540
          %v1605 = vpack.c.b16 %v1541, %v1541
          %v1606 = vpack.c.b16 %v1542, %v1542
          %v1607 = vpack.c.b16 %v1543, %v1543
          %v1608 = vpack.c.b16 %v1544, %v1544
          %v1609 = vpack.c.b16 %v1545, %v1545
          %v1610 = vpack.c.b16 %v1546, %v1546
          %v1611 = vpack.c.b16 %v1547, %v1547
          %v1612 = vpack.c.b16 %v1548, %v1548
          %v1613 = vpack.c.b16 %v1549, %v1549
          %v1614 = vpack.c.b16 %v1550, %v1550
          %v1615 = vpack.c.b16 %v1551, %v1551
          %v1616 = vpack.c.b16 %v1552, %v1552
          %v1617 = vpack.c.b16 %v1553, %v1553
          %v1618 = vpack.c.b16 %v1554, %v1554
          %v1619 = vpack.c.b16 %v1555, %v1555
          %v1620 = vpack.c.b16 %v1556, %v1556
          %v1621 = vpack.c.b16 %v1557, %v1557
          %v1622 = vpack.c.b16 %v1558, %v1558
          %v1623 = vpack.c.b16 %v1559, %v1559
          %v1624 = vpack.c.b16 %v1560, %v1560
          %v1625 = vpack.c.b16 %v1561, %v1561
          %v1626 = vpack.c.b16 %v1562, %v1562
          %v1627 = vpack.c.b16 %v1563, %v1563
          %v1628 = vpack.c.b16 %v1564, %v1564
          %v1629 = vpack.c.b16 %v1565, %v1565
          %v1630 = vpack.c.b16 %v1566, %v1566
          %v1631 = vpack.c.b16 %v1567, %v1567
          %v1632 = vpack.c.b16 %v1568, %v1568
          %v1633 = vpack.c.b16 %v1569, %v1569
          %v1634 = vpack.c.b16 %v1570, %v1570
          %v1635 = vpack.c.b16 %v1571, %v1571
          %v1636 = vpack.c.b16 %v1572, %v1572
          %v1637 = vpack.c.b16 %v1573, %v1573
          %v1638 = vpack.c.b16 %v1574, %v1574
          %v1639 = vpack.c.b16 %v1575, %v1575
          %v1640 = vpack.c.b16 %v1576, %v1576
          %v1641 = vpack.c.b16 %v1577, %v1577
          %v1642 = vpack.c.b16 %v1578, %v1578
          %v1643 = vpack.c.b16 %v1579, %v1579
          %v1644 = vpack.c.b16 %v1580, %v1580
          %v1645 = vpack.c.b16 %v1581, %v1581
          %v1646 = vpack.c.b16 %v1582, %v1582
          %v1647 = vpack.c.b16 %v1583, %v1583
          %1712 = vst [vmem:[%s249] sm:$0xf] %v1584
          %1713 = vst [vmem:[%s249 + $0x4] sm:$0xf] %v1585
          %1714 = vst [vmem:[%s249 + $0x8] sm:$0xf] %v1586
          %1715 = vst [vmem:[%s249 + $0xc] sm:$0xf] %v1587
          %1716 = vst [vmem:[%s249 + $0x10] sm:$0xf] %v1588
          %1717 = vst [vmem:[%s249 + $0x14] sm:$0xf] %v1589
          %1718 = vst [vmem:[%s249 + $0x18] sm:$0xf] %v1590
          %1719 = vst [vmem:[%s249 + $0x1c] sm:$0xf] %v1591
          %1720 = vst [vmem:[%s249 + $0x20] sm:$0xf] %v1592
          %1721 = vst [vmem:[%s249 + $0x24] sm:$0xf] %v1593
          %1722 = vst [vmem:[%s249 + $0x28] sm:$0xf] %v1594
          %1723 = vst [vmem:[%s249 + $0x2c] sm:$0xf] %v1595
          %1724 = vst [vmem:[%s249 + $0x30] sm:$0xf] %v1596
          %1725 = vst [vmem:[%s249 + $0x34] sm:$0xf] %v1597
          %1726 = vst [vmem:[%s249 + $0x38] sm:$0xf] %v1598
          %1727 = vst [vmem:[%s249 + $0x3c] sm:$0xf] %v1599
          %1728 = vst [vmem:[%s249 + $0x40] sm:$0xf] %v1600
          %1729 = vst [vmem:[%s249 + $0x44] sm:$0xf] %v1601
          %1730 = vst [vmem:[%s249 + $0x48] sm:$0xf] %v1602
          %1731 = vst [vmem:[%s249 + $0x4c] sm:$0xf] %v1603
          %1732 = vst [vmem:[%s249 + $0x50] sm:$0xf] %v1604
          %1733 = vst [vmem:[%s249 + $0x54] sm:$0xf] %v1605
          %1734 = vst [vmem:[%s249 + $0x58] sm:$0xf] %v1606
          %1735 = vst [vmem:[%s249 + $0x5c] sm:$0xf] %v1607
          %1736 = vst [vmem:[%s249 + $0x60] sm:$0xf] %v1608
          %1737 = vst [vmem:[%s249 + $0x64] sm:$0xf] %v1609
          %1738 = vst [vmem:[%s249 + $0x68] sm:$0xf] %v1610
          %1739 = vst [vmem:[%s249 + $0x6c] sm:$0xf] %v1611
          %1740 = vst [vmem:[%s249 + $0x70] sm:$0xf] %v1612
          %1741 = vst [vmem:[%s249 + $0x74] sm:$0xf] %v1613
          %1742 = vst [vmem:[%s249 + $0x78] sm:$0xf] %v1614
          %1743 = vst [vmem:[%s249 + $0x7c] sm:$0xf] %v1615
          %1744 = vst [vmem:[%s249 + $0x80] sm:$0xf] %v1616
          %1745 = vst [vmem:[%s249 + $0x84] sm:$0xf] %v1617
          %1746 = vst [vmem:[%s249 + $0x88] sm:$0xf] %v1618
          %1747 = vst [vmem:[%s249 + $0x8c] sm:$0xf] %v1619
          %1748 = vst [vmem:[%s249 + $0x90] sm:$0xf] %v1620
          %1749 = vst [vmem:[%s249 + $0x94] sm:$0xf] %v1621
          %1750 = vst [vmem:[%s249 + $0x98] sm:$0xf] %v1622
          %1751 = vst [vmem:[%s249 + $0x9c] sm:$0xf] %v1623
          %1752 = vst [vmem:[%s249 + $0xa0] sm:$0xf] %v1624
          %1753 = vst [vmem:[%s249 + $0xa4] sm:$0xf] %v1625
          %1754 = vst [vmem:[%s249 + $0xa8] sm:$0xf] %v1626
          %1755 = vst [vmem:[%s249 + $0xac] sm:$0xf] %v1627
          %1756 = vst [vmem:[%s249 + $0xb0] sm:$0xf] %v1628
          %1757 = vst [vmem:[%s249 + $0xb4] sm:$0xf] %v1629
          %1758 = vst [vmem:[%s249 + $0xb8] sm:$0xf] %v1630
          %1759 = vst [vmem:[%s249 + $0xbc] sm:$0xf] %v1631
          %1760 = vst [vmem:[%s249 + $0xc0] sm:$0xf] %v1632
          %1761 = vst [vmem:[%s249 + $0xc4] sm:$0xf] %v1633
          %1762 = vst [vmem:[%s249 + $0xc8] sm:$0xf] %v1634
          %1763 = vst [vmem:[%s249 + $0xcc] sm:$0xf] %v1635
          %1764 = vst [vmem:[%s249 + $0xd0] sm:$0xf] %v1636
          %1765 = vst [vmem:[%s249 + $0xd4] sm:$0xf] %v1637
          %1766 = vst [vmem:[%s249 + $0xd8] sm:$0xf] %v1638
          %1767 = vst [vmem:[%s249 + $0xdc] sm:$0xf] %v1639
          %1768 = vst [vmem:[%s249 + $0xe0] sm:$0xf] %v1640
          %1769 = vst [vmem:[%s249 + $0xe4] sm:$0xf] %v1641
          %1770 = vst [vmem:[%s249 + $0xe8] sm:$0xf] %v1642
          %1771 = vst [vmem:[%s249 + $0xec] sm:$0xf] %v1643
          %1772 = vst [vmem:[%s249 + $0xf0] sm:$0xf] %v1644
          %1773 = vst [vmem:[%s249 + $0xf4] sm:$0xf] %v1645
          %1774 = vst [vmem:[%s249 + $0xf8] sm:$0xf] %v1646
          %1775 = vst [vmem:[%s249 + $0xfc] sm:$0xf] %v1647
        $region48: #{tpu_custom_call.1} parent=31 // pred_fallthru
          _
        %s1776 = sand.u32 %s132, 1
        %s1777 = scalar_lea.sflag [#allocation5], %s1776
        %s1778 = sand.u32 %s132, 1
        %s1779 = smul.addr %s1778, 256
        %s1780 = scalar_lea.vmem [#allocation8], %s1779
        // Predicated region
        $region49: #{tpu_custom_call.1} parent=31 // pred_check
          %p1781 = pneg %p142
        $region50: #{tpu_custom_call.1} parent=31 // pred_check_branch
          %1783 = sbr.rel (%p1781) target = $region52
        $region51: #{tpu_custom_call.1} parent=31 // pred_region
          %s1784 = smul.u32 64, %s26
          %s1786 = ssub.s32 4096, 4096
          %1787 = vsyncadd %s1777, %s1786
          %s1788 = sadd.s32 %s27, %s1784
          %s1789 = smul.addr %s1788, 64
          %s1790 = scalar_lea.hbm %s3, %s1789
          %s1791 = sshll.u32 %s1780, 4
          %s1792 = int_to_ptr.vmem [resolvable:$true] %s1791
          %1797 = dma.vmem_to_hbm [thread:$0]  %s1792, 4096, %s1790, %s1777, 64, 64, 4
        $region52: #{tpu_custom_call.1} parent=31 // pred_fallthru
          _
      $region32: #{tpu_custom_call.1} parent=5 // pred_fallthru
        _
      %p1798 = scmp.le.s32.totalorder 2, %s16
      // Predicated region
      $region53: #{tpu_custom_call.1} parent=5 // pred_check
        %p1799 = pneg %p1798
      $region54: #{tpu_custom_call.1} parent=5 // pred_check_branch
        %1801 = sbr.rel (%p1799) target = $region56
      $region55: #{tpu_custom_call.1} parent=5 // pred_region
        %s1802 = ssub.s32 %s16, 2
        // Predicated region
        $region57: #{tpu_custom_call.1} parent=55 // pred_check
          %p1803 = pneg %p148
        $region58: #{tpu_custom_call.1} parent=55 // pred_check_branch
          %1805 = sbr.rel (%p1803) target = $region60
        $region59: #{tpu_custom_call.1} parent=55 // pred_region
          %s1806 = sand.u32 %s133, 1
          %s1807 = scalar_lea.sflag [#allocation5], %s1806
          %s1808 = sand.u32 %s133, 1
          %s1809 = smul.addr %s1808, 256
          %s1810 = scalar_lea.vmem [#allocation8], %s1809
          %1811 = dma.done %s1807, 4096
        $region60: #{tpu_custom_call.1} parent=55 // pred_fallthru
          _
      $region56: #{tpu_custom_call.1} parent=5 // pred_fallthru
        _
    $region6: #{tpu_custom_call.1} parent=1 // loop_footer
      %s20 = sadd.s32 1, %s16
    $region7: #{tpu_custom_call.1} parent=1 // loop_footer_branch
      %15 = sbr.rel target = $region3
    $region8: #{tpu_custom_call.1} parent=1 // loop_exit
      _
    %1812 = vsyncpa [#allocation4], 1
    %s1813 = scalar_lea.sflag [#allocation4], 1
    %1814 = vsyncpa %s1813, 1
    %1815 = vsyncpa [#allocation7], 1
    %1816 = vsyncpa [#allocation5], 1
    %s1817 = scalar_lea.sflag [#allocation5], 1
    %1818 = vsyncpa %s1817, 1

</llo_original>
